<compile_context>
chip_gen: v6e
topology: v6e:2x2x1
jax: 0.10.0
libtpu: 0.0.40
codegen_flags: <defaults>
</compile_context>

<pallas_src>
import jax
import jax.numpy as jnp
from jax.experimental import pallas as pl
from jax.experimental.pallas import tpu as pltpu


OUT_MIN = 0.01
OUT_MAX = 0.5

_TARGET_TILE_LANES = 2048  # multiple of 128; per-tile lane target for big scales


# ----------------------------------------------------------------------------
# Tiling plan helpers (trace-time, pure Python)
# ----------------------------------------------------------------------------
def _vmem_budget_bytes():
    """3/4 of this generation's physical VMEM (fallback 32 MiB)."""
    try:
        cap = int(pltpu.get_tpu_info().vmem_capacity_bytes)
    except Exception:
        cap = 32 * 1024 * 1024
    return (cap * 3) // 4


def _largest_tile(hw, target):
    """Largest divisor of hw that is a multiple of 128 and <= target (or None)."""
    best = None
    d = 128
    while d <= min(hw, target):
        if hw % d == 0:
            best = d
        d += 128
    return best


def _plan_tiling(hw_list, ch_list, batch, itemsize, vmem_budget):
    """Returns (num_tiles, [(tile_lanes, is_tiled) per scale])."""
    hw_max = max(hw_list)
    target = _TARGET_TILE_LANES
    # Prefer >= 2 tiles on the dominant scale so the DMA actually pipelines.
    if hw_max % 256 == 0:
        target = min(target, hw_max // 2)
    while True:
        tile = _largest_tile(hw_max, target)
        nt = hw_max // tile if tile is not None else 1
        plan = []
        for hw in hw_list:
            ts = hw // nt if nt > 0 else hw
            if nt > 1 and hw % nt == 0 and ts % 128 == 0:
                plan.append((ts, True))       # streamed in 128-multiple tiles
            else:
                plan.append((hw, False))      # full extent, resident across grid
        # Crude footprint estimate (2x for double buffering) vs scoped VMEM.
        fmap_bytes = sum(2 * batch * c * ts * itemsize
                         for (ts, _t), c in zip(plan, ch_list))
        acc_bytes = sum(batch * c * 128 * 4
                        for (_ts, t), c in zip(plan, ch_list) if t)
        if fmap_bytes + acc_bytes <= vmem_budget or target <= 128:
            return nt, plan
        target = max(128, target // 2)


# ----------------------------------------------------------------------------
# Fused kernel: [tiled global-avg-pool per scale] + concat@W1 fold + MLP + sigmoid
# ----------------------------------------------------------------------------
def _make_fused_kernel(num_scales, inv_hw, tiled, chunk_counts):
    """Ref order: fmap_0..S-1, w1_0..S-1, b1, w2, b2, w3, b3, o_ref, acc_0..acc_{n_tiled-1}."""

    def kernel(*refs):
        fmap_refs = refs[:num_scales]
        w1_refs = refs[num_scales:2 * num_scales]
        (b1_ref, w2_ref, b2_ref, w3_ref, b3_ref, o_ref) = refs[2 * num_scales:
                                                               2 * num_scales + 6]
        acc_refs = refs[2 * num_scales + 6:]

        t = pl.program_id(0)
        nt = pl.num_programs(0)

        # ---- prologue: zero lane-partial accumulators -----------------------
        if acc_refs:
            @pl.when(t == 0)
            def _zero():
                for acc in acc_refs:
                    acc[...] = jnp.zeros_like(acc)

        # ---- steady state: VPU lane-wise partial sums for streamed scales ---
        acc_i = 0
        for i in range(num_scales):
            if not tiled[i]:
                continue
            x = fmap_refs[i][...].astype(jnp.float32)      # (B, Ci, TS), TS=k*128
            s = x[:, :, 0:128]
            for k in range(1, chunk_counts[i]):
                s = s + x[:, :, k * 128:(k + 1) * 128]     # pure VPU adds
            acc_refs[acc_i][...] += s                      # (B, Ci, 128) f32
            acc_i += 1

        # ---- epilogue: cross-lane reduce, folded concat@W1, MLP, sigmoid ----
        @pl.when(t == nt - 1)
        def _epilogue():
            h1 = b1_ref[...].astype(jnp.float32)           # (1, 64), broadcasts
            acc_j = 0
            for i in range(num_scales):
                if tiled[i]:
                    pooled = jnp.sum(acc_refs[acc_j][...], axis=-1) * inv_hw[i]
                    acc_j += 1
                else:
                    x = fmap_refs[i][...].astype(jnp.float32)
                    pooled = jnp.sum(x, axis=-1) * inv_hw[i]
                # concat(pooled_i) @ W1 == sum_i pooled_i @ W1[rows_i]
                h1 = h1 + jnp.dot(pooled, w1_refs[i][...],
                                  preferred_element_type=jnp.float32)
            h1 = jnp.maximum(h1, 0.0)
            h2 = jnp.dot(h1, w2_ref[...],
                         preferred_element_type=jnp.float32) + b2_ref[...]
            h2 = jnp.maximum(h2, 0.0)
            raw = jnp.dot(h2, w3_ref[...],
                          preferred_element_type=jnp.float32) + b3_ref[...]
            # exp rides the EUP; reciprocal avoids a VALU divide.
            sig = pl.reciprocal(1.0 + jnp.exp(-raw), approx=False)
            o_ref[...] = (OUT_MIN + (OUT_MAX - OUT_MIN) * sig).astype(o_ref.dtype)

    return kernel


# ----------------------------------------------------------------------------
# RatioPredictor wrapper (param prep / tiling plan; single pallas_call)
# ----------------------------------------------------------------------------
def init_ratio_predictor_params(depth_channels_list, key):
    """Deterministic init matching nn.Linear shapes (stored as (in, out))."""
    total = sum(depth_channels_list)
    dims = [(total, 64), (64, 32), (32, 1)]
    params = []
    for (fan_in, fan_out) in dims:
        key, kw, kb = jax.random.split(key, 3)
        bound = 1.0 / jnp.sqrt(jnp.float32(fan_in))
        w = jax.random.uniform(kw, (fan_in, fan_out), jnp.float32, -bound, bound)
        b = jax.random.uniform(kb, (1, fan_out), jnp.float32, -bound, bound)
        params.extend([w, b])
    return tuple(params)


def ratio_predictor_forward(depth_feature_maps, params, depth_channels_list):
    num_scales = len(depth_channels_list)
    assert len(depth_feature_maps) == num_scales, (
        f"Expected {num_scales} depth feature maps, got {len(depth_feature_maps)}")
    w1, b1, w2, b2, w3, b3 = params

    B = depth_feature_maps[0].shape[0]
    fmaps_flat, hw_list, inv_hw = [], [], []
    for i, fmap in enumerate(depth_feature_maps):
        Bi, Ci, Hi, Wi = fmap.shape
        assert Bi == B
        assert Ci == depth_channels_list[i], (
            f"Expected {depth_channels_list[i]} channels for scale {i}, got {Ci}")
        fmaps_flat.append(fmap.reshape(B, Ci, Hi * Wi))    # spatial axis -> lanes
        hw_list.append(Hi * Wi)
        inv_hw.append(1.0 / float(Hi * Wi))

    # Split W1 row-wise per scale (static slices, once, outside the kernel).
    w1_parts, off = [], 0
    for c in depth_channels_list:
        w1_parts.append(w1[off:off + c, :])
        off += c

    # --- tiling plan & VMEM budget (per TPU generation) ----------------------
    vmem_budget = _vmem_budget_bytes()
    itemsize = max(f.dtype.itemsize for f in fmaps_flat)
    nt, plan = _plan_tiling(hw_list, depth_channels_list, B, itemsize, vmem_budget)
    tiled = tuple(t for (_ts, t) in plan)
    chunk_counts = tuple((ts // 128) if t else 0 for (ts, t) in plan)

    kernel = _make_fused_kernel(num_scales, tuple(inv_hw), tiled, chunk_counts)

    # --- BlockSpecs ----------------------------------------------------------
    in_specs = []
    for i, fmap in enumerate(fmaps_flat):
        ts, is_tiled = plan[i]
        Ci = depth_channels_list[i]
        if is_tiled:
            in_specs.append(pl.BlockSpec((B, Ci, ts), lambda t: (0, 0, t)))
        else:
            in_specs.append(pl.BlockSpec((B, Ci, hw_list[i]), lambda t: (0, 0, 0)))
    for c in depth_channels_list:
        in_specs.append(pl.BlockSpec((c, 64), lambda t: (0, 0)))
    in_specs += [
        pl.BlockSpec((1, 64), lambda t: (0, 0)),   # b1
        pl.BlockSpec((64, 32), lambda t: (0, 0)),  # w2
        pl.BlockSpec((1, 32), lambda t: (0, 0)),   # b2
        pl.BlockSpec((32, 1), lambda t: (0, 0)),   # w3
        pl.BlockSpec((1, 1), lambda t: (0, 0)),    # b3
    ]
    out_specs = pl.BlockSpec((B, 1), lambda t: (0, 0))

    scratch_shapes = [pltpu.VMEM((B, c, 128), jnp.float32)
                      for (_ts, t), c in zip(plan, depth_channels_list) if t]

    # --- cost estimate (lets XLA overlap this mem-bound call) ----------------
    c_total = sum(depth_channels_list)
    bytes_accessed = sum(int(f.size) * f.dtype.itemsize for f in fmaps_flat)
    bytes_accessed += sum(int(p.size) * p.dtype.itemsize
                          for p in (w1, b1, w2, b2, w3, b3))
    bytes_accessed += B * 4
    flops = sum(B * c * hw for c, hw in zip(depth_channels_list, hw_list))
    flops += 2 * B * (c_total * 64 + 64 * 32 + 32 * 1)
    cost = pl.CostEstimate(flops=int(flops), transcendentals=int(B),
                           bytes_accessed=int(bytes_accessed))

    return pl.pallas_call(
        kernel,
        out_shape=jax.ShapeDtypeStruct((B, 1), w1.dtype),
        grid=(nt,),
        in_specs=in_specs,
        out_specs=out_specs,
        scratch_shapes=scratch_shapes,
        compiler_params=pltpu.CompilerParams(
            dimension_semantics=("arbitrary",),     # H*W axis is a reduction
            vmem_limit_bytes=int(vmem_budget)),
        cost_estimate=cost,
    )(*fmaps_flat, *w1_parts, b1, w2, b2, w3, b3)


# ----------------------------------------------------------------------------
# Pure-JAX reference for correctness check
# ----------------------------------------------------------------------------
def _reference(depth_feature_maps, params):
    w1, b1, w2, b2, w3, b3 = params
    pooled = [jnp.mean(f.astype(jnp.float32), axis=(2, 3)) for f in depth_feature_maps]
    x = jnp.concatenate(pooled, axis=1)
    h1 = jnp.maximum(x @ w1 + b1, 0.0)
    h2 = jnp.maximum(h1 @ w2 + b2, 0.0)
    raw = h2 @ w3 + b3
    return OUT_MIN + (OUT_MAX - OUT_MIN) * jax.nn.sigmoid(raw)


if __name__ == "__main__":
    key = jax.random.PRNGKey(0)

    depth_channels_list = [8, 16, 32, 64]
    spatial_sizes = [16, 8, 4, 2]
    B = 2

    # Build deterministic multi-scale feature maps (NCHW).
    feats = []
    k = key
    for c, s in zip(depth_channels_list, spatial_sizes):
        k, sub = jax.random.split(k)
        feats.append(jax.random.normal(sub, (B, c, s, s), jnp.float32))

    k, pkey = jax.random.split(k)
    params = init_ratio_predictor_params(depth_channels_list, pkey)

    out = ratio_predictor_forward(feats, params, depth_channels_list)
    out = jax.block_until_ready(out)

    ref = _reference(feats, params)
    assert out.shape == (B, 1), out.shape
    assert jnp.allclose(out, ref, atol=1e-5, rtol=1e-5), (out, ref)

    print("KERNEL_OK")
</pallas_src>

<mosaic_0001>
module attributes {stable_mosaic.version = 11 : i64} {
  func.func @kernel(%arg0: i32, %arg1: memref<2x8x128xf32, #tpu.memory_space<vmem>>, %arg2: memref<2x16x64xf32, #tpu.memory_space<vmem>>, %arg3: memref<2x32x16xf32, #tpu.memory_space<vmem>>, %arg4: memref<2x64x4xf32, #tpu.memory_space<vmem>>, %arg5: memref<8x64xf32, #tpu.memory_space<vmem>>, %arg6: memref<16x64xf32, #tpu.memory_space<vmem>>, %arg7: memref<32x64xf32, #tpu.memory_space<vmem>>, %arg8: memref<64x64xf32, #tpu.memory_space<vmem>>, %arg9: memref<1x64xf32, #tpu.memory_space<vmem>>, %arg10: memref<64x32xf32, #tpu.memory_space<vmem>>, %arg11: memref<1x32xf32, #tpu.memory_space<vmem>>, %arg12: memref<32x1xf32, #tpu.memory_space<vmem>>, %arg13: memref<1x1xf32, #tpu.memory_space<vmem>>, %arg14: memref<2x1xf32, #tpu.memory_space<vmem>>, %arg15: memref<2x8x128xf32, #tpu.memory_space<vmem>>) attributes {dimension_semantics = [#tpu.dimension_semantics<arbitrary>], iteration_bounds = array<i64: 2>, scalar_prefetch = 0 : i64, scratch_operands = 1 : i64, tpu.core_type = #tpu.core_type<tc>, window_params = [{transform_indices = @transform_0, window_bounds = array<i64: 2, 8, 128>}, {pipeline_mode = #tpu.pipeline_mode<synchronous>, transform_indices = @transform_1, window_bounds = array<i64: 2, 16, 64>}, {pipeline_mode = #tpu.pipeline_mode<synchronous>, transform_indices = @transform_2, window_bounds = array<i64: 2, 32, 16>}, {pipeline_mode = #tpu.pipeline_mode<synchronous>, transform_indices = @transform_3, window_bounds = array<i64: 2, 64, 4>}, {pipeline_mode = #tpu.pipeline_mode<synchronous>, transform_indices = @transform_4, window_bounds = array<i64: 8, 64>}, {pipeline_mode = #tpu.pipeline_mode<synchronous>, transform_indices = @transform_5, window_bounds = array<i64: 16, 64>}, {pipeline_mode = #tpu.pipeline_mode<synchronous>, transform_indices = @transform_6, window_bounds = array<i64: 32, 64>}, {pipeline_mode = #tpu.pipeline_mode<synchronous>, transform_indices = @transform_7, window_bounds = array<i64: 64, 64>}, {pipeline_mode = #tpu.pipeline_mode<synchronous>, transform_indices = @transform_8, window_bounds = array<i64: 1, 64>}, {pipeline_mode = #tpu.pipeline_mode<synchronous>, transform_indices = @transform_9, window_bounds = array<i64: 64, 32>}, {pipeline_mode = #tpu.pipeline_mode<synchronous>, transform_indices = @transform_10, window_bounds = array<i64: 1, 32>}, {pipeline_mode = #tpu.pipeline_mode<synchronous>, transform_indices = @transform_11, window_bounds = array<i64: 32, 1>}, {pipeline_mode = #tpu.pipeline_mode<synchronous>, transform_indices = @transform_12, window_bounds = array<i64: 1, 1>}, {pipeline_mode = #tpu.pipeline_mode<synchronous>, transform_indices = @transform_13, window_bounds = array<i64: 2, 1>}]} {
    %c0_i32 = arith.constant 0 : i32
    %0 = arith.cmpi eq, %arg0, %c0_i32 : i32
    %1 = arith.extui %0 : i1 to i32
    %c0_i32_0 = arith.constant 0 : i32
    %2 = arith.cmpi ne, %1, %c0_i32_0 : i32
    scf.if %2 {
      %cst = arith.constant 0.000000e+00 : f32
      %10 = vector.broadcast %cst : f32 to vector<2x8x128xf32>
      %c0_10 = arith.constant 0 : index
      %c0_11 = arith.constant 0 : index
      %c0_12 = arith.constant 0 : index
      %11 = vector.load %arg15[%c0_10, %c0_11, %c0_12] : memref<2x8x128xf32, #tpu.memory_space<vmem>>, vector<2x8x128xf32>
      tpu.vector_store %arg15[%c0_10, %c0_11, %c0_12], %10 {strides = array<i32>} : memref<2x8x128xf32, #tpu.memory_space<vmem>>, vector<2x8x128xf32>,
    } else {
    }
    %c0 = arith.constant 0 : index
    %c0_1 = arith.constant 0 : index
    %c0_2 = arith.constant 0 : index
    %3 = vector.load %arg1[%c0, %c0_1, %c0_2] : memref<2x8x128xf32, #tpu.memory_space<vmem>>, vector<2x8x128xf32>
    %c0_3 = arith.constant 0 : index
    %c0_4 = arith.constant 0 : index
    %c0_5 = arith.constant 0 : index
    %4 = vector.load %arg15[%c0_3, %c0_4, %c0_5] : memref<2x8x128xf32, #tpu.memory_space<vmem>>, vector<2x8x128xf32>
    %5 = arith.addf %4, %3 : vector<2x8x128xf32>
    %c0_6 = arith.constant 0 : index
    %c0_7 = arith.constant 0 : index
    %c0_8 = arith.constant 0 : index
    %6 = vector.load %arg15[%c0_6, %c0_7, %c0_8] : memref<2x8x128xf32, #tpu.memory_space<vmem>>, vector<2x8x128xf32>
    tpu.vector_store %arg15[%c0_6, %c0_7, %c0_8], %5 {strides = array<i32>} : memref<2x8x128xf32, #tpu.memory_space<vmem>>, vector<2x8x128xf32>,
    %c1_i32 = arith.constant 1 : i32
    %7 = arith.cmpi eq, %arg0, %c1_i32 : i32
    %8 = arith.extui %7 : i1 to i32
    %c0_i32_9 = arith.constant 0 : i32
    %9 = arith.cmpi ne, %8, %c0_i32_9 : i32
    scf.if %9 {
      %c0_10 = arith.constant 0 : index
      %c0_11 = arith.constant 0 : index
      %10 = vector.load %arg9[%c0_10, %c0_11] : memref<1x64xf32, #tpu.memory_space<vmem>>, vector<1x64xf32>
      %c0_12 = arith.constant 0 : index
      %c0_13 = arith.constant 0 : index
      %c0_14 = arith.constant 0 : index
      %11 = vector.load %arg15[%c0_12, %c0_13, %c0_14] : memref<2x8x128xf32, #tpu.memory_space<vmem>>, vector<2x8x128xf32>
      %cst = arith.constant dense<0.000000e+00> : vector<2x8xf32>
      %12 = vector.multi_reduction <add>, %11, %cst [2] : vector<2x8x128xf32> to vector<2x8xf32>
      %cst_15 = arith.constant 3.906250e-03 : f32
      %13 = vector.broadcast %cst_15 : f32 to vector<2x8xf32>
      %14 = arith.mulf %12, %13 : vector<2x8xf32>
      %c0_16 = arith.constant 0 : index
      %c0_17 = arith.constant 0 : index
      %15 = vector.load %arg5[%c0_16, %c0_17] : memref<8x64xf32, #tpu.memory_space<vmem>>, vector<8x64xf32>
      %cst_18 = arith.constant dense<0.000000e+00> : vector<2x64xf32>
      %16 = tpu.matmul %14, %15, %cst_18 {dimension_numbers = #tpu.dot_dimension_numbers<[1], [0], [0], [1], [0, 0, 1, 1], [], []>} : vector<2x8xf32>, vector<8x64xf32>, vector<2x64xf32> -> vector<2x64xf32>
      %17 = vector.broadcast %10 : vector<1x64xf32> to vector<2x64xf32>
      %18 = arith.addf %17, %16 : vector<2x64xf32>
      %c0_19 = arith.constant 0 : index
      %c0_20 = arith.constant 0 : index
      %c0_21 = arith.constant 0 : index
      %19 = vector.load %arg2[%c0_19, %c0_20, %c0_21] : memref<2x16x64xf32, #tpu.memory_space<vmem>>, vector<2x16x64xf32>
      %cst_22 = arith.constant dense<0.000000e+00> : vector<2x16xf32>
      %20 = vector.multi_reduction <add>, %19, %cst_22 [2] : vector<2x16x64xf32> to vector<2x16xf32>
      %cst_23 = arith.constant 1.562500e-02 : f32
      %21 = vector.broadcast %cst_23 : f32 to vector<2x16xf32>
      %22 = arith.mulf %20, %21 : vector<2x16xf32>
      %c0_24 = arith.constant 0 : index
      %c0_25 = arith.constant 0 : index
      %23 = vector.load %arg6[%c0_24, %c0_25] : memref<16x64xf32, #tpu.memory_space<vmem>>, vector<16x64xf32>
      %cst_26 = arith.constant dense<0.000000e+00> : vector<2x64xf32>
      %24 = tpu.matmul %22, %23, %cst_26 {dimension_numbers = #tpu.dot_dimension_numbers<[1], [0], [0], [1], [0, 0, 1, 1], [], []>} : vector<2x16xf32>, vector<16x64xf32>, vector<2x64xf32> -> vector<2x64xf32>
      %25 = arith.addf %18, %24 : vector<2x64xf32>
      %c0_27 = arith.constant 0 : index
      %c0_28 = arith.constant 0 : index
      %c0_29 = arith.constant 0 : index
      %26 = vector.load %arg3[%c0_27, %c0_28, %c0_29] : memref<2x32x16xf32, #tpu.memory_space<vmem>>, vector<2x32x16xf32>
      %cst_30 = arith.constant dense<0.000000e+00> : vector<2x32xf32>
      %27 = vector.multi_reduction <add>, %26, %cst_30 [2] : vector<2x32x16xf32> to vector<2x32xf32>
      %cst_31 = arith.constant 6.250000e-02 : f32
      %28 = vector.broadcast %cst_31 : f32 to vector<2x32xf32>
      %29 = arith.mulf %27, %28 : vector<2x32xf32>
      %c0_32 = arith.constant 0 : index
      %c0_33 = arith.constant 0 : index
      %30 = vector.load %arg7[%c0_32, %c0_33] : memref<32x64xf32, #tpu.memory_space<vmem>>, vector<32x64xf32>
      %cst_34 = arith.constant dense<0.000000e+00> : vector<2x64xf32>
      %31 = tpu.matmul %29, %30, %cst_34 {dimension_numbers = #tpu.dot_dimension_numbers<[1], [0], [0], [1], [0, 0, 1, 1], [], []>} : vector<2x32xf32>, vector<32x64xf32>, vector<2x64xf32> -> vector<2x64xf32>
      %32 = arith.addf %25, %31 : vector<2x64xf32>
      %c0_35 = arith.constant 0 : index
      %c0_36 = arith.constant 0 : index
      %c0_37 = arith.constant 0 : index
      %33 = vector.load %arg4[%c0_35, %c0_36, %c0_37] : memref<2x64x4xf32, #tpu.memory_space<vmem>>, vector<2x64x4xf32>
      %cst_38 = arith.constant dense<0.000000e+00> : vector<2x64xf32>
      %34 = vector.multi_reduction <add>, %33, %cst_38 [2] : vector<2x64x4xf32> to vector<2x64xf32>
      %cst_39 = arith.constant 2.500000e-01 : f32
      %35 = vector.broadcast %cst_39 : f32 to vector<2x64xf32>
      %36 = arith.mulf %34, %35 : vector<2x64xf32>
      %c0_40 = arith.constant 0 : index
      %c0_41 = arith.constant 0 : index
      %37 = vector.load %arg8[%c0_40, %c0_41] : memref<64x64xf32, #tpu.memory_space<vmem>>, vector<64x64xf32>
      %cst_42 = arith.constant dense<0.000000e+00> : vector<2x64xf32>
      %38 = tpu.matmul %36, %37, %cst_42 {dimension_numbers = #tpu.dot_dimension_numbers<[1], [0], [0], [1], [0, 0, 1, 1], [], []>} : vector<2x64xf32>, vector<64x64xf32>, vector<2x64xf32> -> vector<2x64xf32>
      %39 = arith.addf %32, %38 : vector<2x64xf32>
      %cst_43 = arith.constant 0.000000e+00 : f32
      %40 = vector.broadcast %cst_43 : f32 to vector<2x64xf32>
      %41 = arith.maximumf %39, %40 : vector<2x64xf32>
      %c0_44 = arith.constant 0 : index
      %c0_45 = arith.constant 0 : index
      %42 = vector.load %arg10[%c0_44, %c0_45] : memref<64x32xf32, #tpu.memory_space<vmem>>, vector<64x32xf32>
      %cst_46 = arith.constant dense<0.000000e+00> : vector<2x32xf32>
      %43 = tpu.matmul %41, %42, %cst_46 {dimension_numbers = #tpu.dot_dimension_numbers<[1], [0], [0], [1], [0, 0, 1, 1], [], []>} : vector<2x64xf32>, vector<64x32xf32>, vector<2x32xf32> -> vector<2x32xf32>
      %c0_47 = arith.constant 0 : index
      %c0_48 = arith.constant 0 : index
      %44 = vector.load %arg11[%c0_47, %c0_48] : memref<1x32xf32, #tpu.memory_space<vmem>>, vector<1x32xf32>
      %45 = vector.broadcast %44 : vector<1x32xf32> to vector<2x32xf32>
      %46 = arith.addf %43, %45 : vector<2x32xf32>
      %cst_49 = arith.constant 0.000000e+00 : f32
      %47 = vector.broadcast %cst_49 : f32 to vector<2x32xf32>
      %48 = arith.maximumf %46, %47 : vector<2x32xf32>
      %c0_50 = arith.constant 0 : index
      %c0_51 = arith.constant 0 : index
      %49 = vector.load %arg12[%c0_50, %c0_51] : memref<32x1xf32, #tpu.memory_space<vmem>>, vector<32x1xf32>
      %cst_52 = arith.constant dense<0.000000e+00> : vector<2x1xf32>
      %50 = tpu.matmul %48, %49, %cst_52 {dimension_numbers = #tpu.dot_dimension_numbers<[1], [0], [0], [1], [0, 0, 1, 1], [], []>} : vector<2x32xf32>, vector<32x1xf32>, vector<2x1xf32> -> vector<2x1xf32>
      %c0_53 = arith.constant 0 : index
      %c0_54 = arith.constant 0 : index
      %51 = vector.load %arg13[%c0_53, %c0_54] : memref<1x1xf32, #tpu.memory_space<vmem>>, vector<1x1xf32>
      %52 = vector.broadcast %51 : vector<1x1xf32> to vector<2x1xf32>
      %53 = arith.addf %50, %52 : vector<2x1xf32>
      %cst_55 = arith.constant 0.000000e+00 : f32
      %54 = vector.broadcast %cst_55 : f32 to vector<2x1xf32>
      %55 = arith.subf %54, %53 : vector<2x1xf32>
      %56 = math.exp %55 : vector<2x1xf32>
      %cst_56 = arith.constant 1.000000e+00 : f32
      %57 = vector.broadcast %cst_56 : f32 to vector<2x1xf32>
      %58 = arith.addf %57, %56 : vector<2x1xf32>
      %59 = tpu.reciprocal %58 : vector<2x1xf32> -> vector<2x1xf32>
      %cst_57 = arith.constant 4.900000e-01 : f32
      %60 = vector.broadcast %cst_57 : f32 to vector<2x1xf32>
      %61 = arith.mulf %60, %59 : vector<2x1xf32>
      %cst_58 = arith.constant 0.00999999977 : f32
      %62 = vector.broadcast %cst_58 : f32 to vector<2x1xf32>
      %63 = arith.addf %62, %61 : vector<2x1xf32>
      %c0_59 = arith.constant 0 : index
      %c0_60 = arith.constant 0 : index
      %64 = vector.load %arg14[%c0_59, %c0_60] : memref<2x1xf32, #tpu.memory_space<vmem>>, vector<2x1xf32>
      tpu.vector_store %arg14[%c0_59, %c0_60], %63 {strides = array<i32>} : memref<2x1xf32, #tpu.memory_space<vmem>>, vector<2x1xf32>,
    } else {
    }
    return
  }
  func.func @transform_0(%arg0: i32) -> (i32, i32, i32) {
    %c0_i32 = arith.constant 0 : i32
    %c0_i32_0 = arith.constant 0 : i32
    %c0_i32_1 = arith.constant 0 : i32
    return %c0_i32, %c0_i32_0, %arg0 : i32, i32, i32
  }
  func.func @transform_1(%arg0: i32) -> (i32, i32, i32) {
    %c0_i32 = arith.constant 0 : i32
    %c0_i32_0 = arith.constant 0 : i32
    %c0_i32_1 = arith.constant 0 : i32
    %c0_i32_2 = arith.constant 0 : i32
    return %c0_i32, %c0_i32_0, %c0_i32_1 : i32, i32, i32
  }
  func.func @transform_2(%arg0: i32) -> (i32, i32, i32) {
    %c0_i32 = arith.constant 0 : i32
    %c0_i32_0 = arith.constant 0 : i32
    %c0_i32_1 = arith.constant 0 : i32
    %c0_i32_2 = arith.constant 0 : i32
    return %c0_i32, %c0_i32_0, %c0_i32_1 : i32, i32, i32
  }
  func.func @transform_3(%arg0: i32) -> (i32, i32, i32) {
    %c0_i32 = arith.constant 0 : i32
    %c0_i32_0 = arith.constant 0 : i32
    %c0_i32_1 = arith.constant 0 : i32
    %c0_i32_2 = arith.constant 0 : i32
    return %c0_i32, %c0_i32_0, %c0_i32_1 : i32, i32, i32
  }
  func.func @transform_4(%arg0: i32) -> (i32, i32) {
    %c0_i32 = arith.constant 0 : i32
    %c0_i32_0 = arith.constant 0 : i32
    %c0_i32_1 = arith.constant 0 : i32
    return %c0_i32, %c0_i32_0 : i32, i32
  }
  func.func @transform_5(%arg0: i32) -> (i32, i32) {
    %c0_i32 = arith.constant 0 : i32
    %c0_i32_0 = arith.constant 0 : i32
    %c0_i32_1 = arith.constant 0 : i32
    return %c0_i32, %c0_i32_0 : i32, i32
  }
  func.func @transform_6(%arg0: i32) -> (i32, i32) {
    %c0_i32 = arith.constant 0 : i32
    %c0_i32_0 = arith.constant 0 : i32
    %c0_i32_1 = arith.constant 0 : i32
    return %c0_i32, %c0_i32_0 : i32, i32
  }
  func.func @transform_7(%arg0: i32) -> (i32, i32) {
    %c0_i32 = arith.constant 0 : i32
    %c0_i32_0 = arith.constant 0 : i32
    %c0_i32_1 = arith.constant 0 : i32
    return %c0_i32, %c0_i32_0 : i32, i32
  }
  func.func @transform_8(%arg0: i32) -> (i32, i32) {
    %c0_i32 = arith.constant 0 : i32
    %c0_i32_0 = arith.constant 0 : i32
    %c0_i32_1 = arith.constant 0 : i32
    return %c0_i32, %c0_i32_0 : i32, i32
  }
  func.func @transform_9(%arg0: i32) -> (i32, i32) {
    %c0_i32 = arith.constant 0 : i32
    %c0_i32_0 = arith.constant 0 : i32
    %c0_i32_1 = arith.constant 0 : i32
    return %c0_i32, %c0_i32_0 : i32, i32
  }
  func.func @transform_10(%arg0: i32) -> (i32, i32) {
    %c0_i32 = arith.constant 0 : i32
    %c0_i32_0 = arith.constant 0 : i32
    %c0_i32_1 = arith.constant 0 : i32
    return %c0_i32, %c0_i32_0 : i32, i32
  }
  func.func @transform_11(%arg0: i32) -> (i32, i32) {
    %c0_i32 = arith.constant 0 : i32
    %c0_i32_0 = arith.constant 0 : i32
    %c0_i32_1 = arith.constant 0 : i32
    return %c0_i32, %c0_i32_0 : i32, i32
  }
  func.func @transform_12(%arg0: i32) -> (i32, i32) {
    %c0_i32 = arith.constant 0 : i32
    %c0_i32_0 = arith.constant 0 : i32
    %c0_i32_1 = arith.constant 0 : i32
    return %c0_i32, %c0_i32_0 : i32, i32
  }
  func.func @transform_13(%arg0: i32) -> (i32, i32) {
    %c0_i32 = arith.constant 0 : i32
    %c0_i32_0 = arith.constant 0 : i32
    %c0_i32_1 = arith.constant 0 : i32
    return %c0_i32, %c0_i32_0 : i32, i32
  }
}

</mosaic_0001>

<llo_original>
// kernel: tpu_custom_call.1
$region0: #{tpu_custom_call.1}
  #allocation0 [shape = 'u32[]', space=smem, size = 0x4, offset = 0x4, fixed_abs, tag = 'smem constant byte address 0x4 - core index']
  #allocation1 [shape = 'u32[144,128]{1,0:T(1,128)}', space=vmem, size = 0x12000, scoped, tag = 'internal scratch']
  #allocation2 [shape = 'f32[2,8,128]{2,1,0:T(8,128)}', space=vmem, size = 0x2000, scoped, tag = 'scratch operand']
  #allocation3 [shape = 'f32[1,1]{1,0:T(1,128)S(1)}', space=vmem, size = 0x200, scoped, tag = 'scoped memory for tpu_custom_call.1']
  %s0 = inlined_call_operand.vmem [shape: f32[2,8,256], index: 0, kind: input, shape index: {}]
  %s1 = inlined_call_operand.vmem [shape: f32[2,16,64], index: 1, kind: input, shape index: {}]
  %s2 = inlined_call_operand.vmem [shape: f32[2,32,16], index: 2, kind: input, shape index: {}]
  %s3 = inlined_call_operand.vmem [shape: f32[2,64,4], index: 3, kind: input, shape index: {}]
  %s4 = inlined_call_operand.vmem [shape: f32[8,64], index: 4, kind: input, shape index: {}]
  %s5 = inlined_call_operand.vmem [shape: f32[16,64], index: 5, kind: input, shape index: {}]
  %s6 = inlined_call_operand.vmem [shape: f32[32,64], index: 6, kind: input, shape index: {}]
  %s7 = inlined_call_operand.vmem [shape: f32[64,64], index: 7, kind: input, shape index: {}]
  %s8 = inlined_call_operand.vmem [shape: f32[1,64], index: 8, kind: input, shape index: {}]
  %s9 = inlined_call_operand.vmem [shape: f32[64,32], index: 9, kind: input, shape index: {}]
  %s10 = inlined_call_operand.vmem [shape: f32[1,32], index: 10, kind: input, shape index: {}]
  %s11 = inlined_call_operand.vmem [shape: f32[32,1], index: 11, kind: input, shape index: {}]
  %s12 = inlined_call_operand.<no memory space> [shape: f32[1,1], index: 12, kind: input, shape index: {}]
  %s13 = inlined_call_operand.vmem [shape: f32[2,1], index: 13, kind: output, shape index: {}]
  %s14 = sld [smem:[#allocation0]]
  $region131: #{tpu_custom_call.1} parent=0
    _
  %s16 = ssub.s32 1, %s14
  %s17 = scalar_select 0, %s16, %s14
  %v18 = vstv %s12
  %19 = vst [vmem:[#allocation3] sm:$0x1] %v18
  $region1: #{tpu_custom_call.1} parent=0
    #allocation4 [shape = 'u8[16384]{0}', space=vmem, size = 0x4000, scoped, tag = 'input window, operand 0']
    loop: start=0, step=1, limit=4
    $region2: #{tpu_custom_call.1} parent=1 // loop_pre_header
      _
    $region3: #{tpu_custom_call.1} parent=1 // loop_header
      %s21 = sphi 0, %s25
      %p22 = scmp.ge.s32.totalorder %s21, 4
      %s31 = sphi 0, %s33
      %s34 = sphi 0, %s31
      %s35 = sphi 0, %s34
      %s51 = sphi 0, %s35
      %s55 = sphi 0, %s55
      %s57 = sphi 0, %s55
      %s58 = sphi 0, %s57
      %s72 = sphi 0, %s58
      %s76 = sphi 0, %s76
      %s78 = sphi 0, %s76
      %s79 = sphi 0, %s78
      %s93 = sphi 0, %s79
      %s97 = sphi 0, %s97
      %s99 = sphi 0, %s97
      %s100 = sphi 0, %s99
      %s114 = sphi 0, %s100
      %s118 = sphi 0, %s118
      %s120 = sphi 0, %s118
      %s121 = sphi 0, %s120
      %s135 = sphi 0, %s121
      %s139 = sphi 0, %s139
      %s141 = sphi 0, %s139
      %s142 = sphi 0, %s141
      %s156 = sphi 0, %s142
      %s160 = sphi 0, %s160
      %s162 = sphi 0, %s160
      %s163 = sphi 0, %s162
      %s177 = sphi 0, %s163
      %s181 = sphi 0, %s181
      %s183 = sphi 0, %s181
      %s184 = sphi 0, %s183
      %s198 = sphi 0, %s184
      %s202 = sphi 0, %s202
      %s204 = sphi 0, %s202
      %s205 = sphi 0, %s204
      %s219 = sphi 0, %s205
      %s223 = sphi 0, %s223
      %s225 = sphi 0, %s223
      %s226 = sphi 0, %s225
      %s240 = sphi 0, %s226
      %s244 = sphi 0, %s244
      %s246 = sphi 0, %s244
      %s247 = sphi 0, %s246
      %s261 = sphi 0, %s247
      %s265 = sphi 0, %s265
      %s267 = sphi 0, %s265
      %s268 = sphi 0, %s267
      %s282 = sphi 0, %s268
      %s286 = sphi 0, %s286
      %s288 = sphi 0, %s286
      %s289 = sphi 0, %s288
      %s303 = sphi 0, %s289
      %s307 = sphi 0, %s307
      %s309 = sphi 0, %s307
      %s310 = sphi 0, %s309
      %s324 = sphi 0, %s310
    $region4: #{tpu_custom_call.1} parent=1 // loop_header_branch
      %24 = sbr.rel (%p22) target = $region8
    $region5: #{tpu_custom_call.1} parent=1 // loop_body
      %s26 = ssub.s32 %s21, 1
      %s27 = ssub.s32 %s21, 2
      %s28 = sadd.s32 %s21, 1
      %s29 = ssub.s32 %s21, %s28
      %p30 = scmp.eq.s32.totalorder %s29, 0
      %s32 = sadd.s32 %s31, 1
      %s33 = scalar_select %p30, %s31, %s32
      %p36 = pneg %p30
      %p37 = scmp.eq.s32.totalorder %s21, 1
      %p38 = por %p36, %p37
      %p39 = scmp.ne.s32.totalorder %s31, %s34
      %p40 = scmp.eq.s32.totalorder %s21, 0
      %p41 = por %p39, %p40
      %p42 = scmp.ne.s32.totalorder %s31, %s34
      %p43 = scmp.eq.s32.totalorder %s26, 1
      %p44 = por %p42, %p43
      %p45 = scmp.ne.s32.totalorder %s34, %s35
      %p46 = scmp.eq.s32.totalorder %s26, 0
      %p47 = por %p45, %p46
      %p48 = scmp.ne.s32.totalorder %s34, %s35
      %p49 = scmp.eq.s32.totalorder %s27, 1
      %p50 = por %p48, %p49
      %p52 = scmp.ne.s32.totalorder %s35, %s51
      %p53 = scmp.eq.s32.totalorder %s27, 0
      %p54 = por %p52, %p53
      %s56 = sadd.s32 %s55, 1
      %p59 = scmp.eq.s32.totalorder %s21, 1
      %p60 = scmp.ne.s32.totalorder %s55, %s57
      %p61 = scmp.eq.s32.totalorder %s21, 0
      %p62 = por %p60, %p61
      %p63 = scmp.ne.s32.totalorder %s55, %s57
      %p64 = scmp.eq.s32.totalorder %s26, 1
      %p65 = por %p63, %p64
      %p66 = scmp.ne.s32.totalorder %s57, %s58
      %p67 = scmp.eq.s32.totalorder %s26, 0
      %p68 = por %p66, %p67
      %p69 = scmp.ne.s32.totalorder %s57, %s58
      %p70 = scmp.eq.s32.totalorder %s27, 1
      %p71 = por %p69, %p70
      %p73 = scmp.ne.s32.totalorder %s58, %s72
      %p74 = scmp.eq.s32.totalorder %s27, 0
      %p75 = por %p73, %p74
      %s77 = sadd.s32 %s76, 1
      %p80 = scmp.eq.s32.totalorder %s21, 1
      %p81 = scmp.ne.s32.totalorder %s76, %s78
      %p82 = scmp.eq.s32.totalorder %s21, 0
      %p83 = por %p81, %p82
      %p84 = scmp.ne.s32.totalorder %s76, %s78
      %p85 = scmp.eq.s32.totalorder %s26, 1
      %p86 = por %p84, %p85
      %p87 = scmp.ne.s32.totalorder %s78, %s79
      %p88 = scmp.eq.s32.totalorder %s26, 0
      %p89 = por %p87, %p88
      %p90 = scmp.ne.s32.totalorder %s78, %s79
      %p91 = scmp.eq.s32.totalorder %s27, 1
      %p92 = por %p90, %p91
      %p94 = scmp.ne.s32.totalorder %s79, %s93
      %p95 = scmp.eq.s32.totalorder %s27, 0
      %p96 = por %p94, %p95
      %s98 = sadd.s32 %s97, 1
      %p101 = scmp.eq.s32.totalorder %s21, 1
      %p102 = scmp.ne.s32.totalorder %s97, %s99
      %p103 = scmp.eq.s32.totalorder %s21, 0
      %p104 = por %p102, %p103
      %p105 = scmp.ne.s32.totalorder %s97, %s99
      %p106 = scmp.eq.s32.totalorder %s26, 1
      %p107 = por %p105, %p106
      %p108 = scmp.ne.s32.totalorder %s99, %s100
      %p109 = scmp.eq.s32.totalorder %s26, 0
      %p110 = por %p108, %p109
      %p111 = scmp.ne.s32.totalorder %s99, %s100
      %p112 = scmp.eq.s32.totalorder %s27, 1
      %p113 = por %p111, %p112
      %p115 = scmp.ne.s32.totalorder %s100, %s114
      %p116 = scmp.eq.s32.totalorder %s27, 0
      %p117 = por %p115, %p116
      %s119 = sadd.s32 %s118, 1
      %p122 = scmp.eq.s32.totalorder %s21, 1
      %p123 = scmp.ne.s32.totalorder %s118, %s120
      %p124 = scmp.eq.s32.totalorder %s21, 0
      %p125 = por %p123, %p124
      %p126 = scmp.ne.s32.totalorder %s118, %s120
      %p127 = scmp.eq.s32.totalorder %s26, 1
      %p128 = por %p126, %p127
      %p129 = scmp.ne.s32.totalorder %s120, %s121
      %p130 = scmp.eq.s32.totalorder %s26, 0
      %p131 = por %p129, %p130
      %p132 = scmp.ne.s32.totalorder %s120, %s121
      %p133 = scmp.eq.s32.totalorder %s27, 1
      %p134 = por %p132, %p133
      %p136 = scmp.ne.s32.totalorder %s121, %s135
      %p137 = scmp.eq.s32.totalorder %s27, 0
      %p138 = por %p136, %p137
      %s140 = sadd.s32 %s139, 1
      %p143 = scmp.eq.s32.totalorder %s21, 1
      %p144 = scmp.ne.s32.totalorder %s139, %s141
      %p145 = scmp.eq.s32.totalorder %s21, 0
      %p146 = por %p144, %p145
      %p147 = scmp.ne.s32.totalorder %s139, %s141
      %p148 = scmp.eq.s32.totalorder %s26, 1
      %p149 = por %p147, %p148
      %p150 = scmp.ne.s32.totalorder %s141, %s142
      %p151 = scmp.eq.s32.totalorder %s26, 0
      %p152 = por %p150, %p151
      %p153 = scmp.ne.s32.totalorder %s141, %s142
      %p154 = scmp.eq.s32.totalorder %s27, 1
      %p155 = por %p153, %p154
      %p157 = scmp.ne.s32.totalorder %s142, %s156
      %p158 = scmp.eq.s32.totalorder %s27, 0
      %p159 = por %p157, %p158
      %s161 = sadd.s32 %s160, 1
      %p164 = scmp.eq.s32.totalorder %s21, 1
      %p165 = scmp.ne.s32.totalorder %s160, %s162
      %p166 = scmp.eq.s32.totalorder %s21, 0
      %p167 = por %p165, %p166
      %p168 = scmp.ne.s32.totalorder %s160, %s162
      %p169 = scmp.eq.s32.totalorder %s26, 1
      %p170 = por %p168, %p169
      %p171 = scmp.ne.s32.totalorder %s162, %s163
      %p172 = scmp.eq.s32.totalorder %s26, 0
      %p173 = por %p171, %p172
      %p174 = scmp.ne.s32.totalorder %s162, %s163
      %p175 = scmp.eq.s32.totalorder %s27, 1
      %p176 = por %p174, %p175
      %p178 = scmp.ne.s32.totalorder %s163, %s177
      %p179 = scmp.eq.s32.totalorder %s27, 0
      %p180 = por %p178, %p179
      %s182 = sadd.s32 %s181, 1
      %p185 = scmp.eq.s32.totalorder %s21, 1
      %p186 = scmp.ne.s32.totalorder %s181, %s183
      %p187 = scmp.eq.s32.totalorder %s21, 0
      %p188 = por %p186, %p187
      %p189 = scmp.ne.s32.totalorder %s181, %s183
      %p190 = scmp.eq.s32.totalorder %s26, 1
      %p191 = por %p189, %p190
      %p192 = scmp.ne.s32.totalorder %s183, %s184
      %p193 = scmp.eq.s32.totalorder %s26, 0
      %p194 = por %p192, %p193
      %p195 = scmp.ne.s32.totalorder %s183, %s184
      %p196 = scmp.eq.s32.totalorder %s27, 1
      %p197 = por %p195, %p196
      %p199 = scmp.ne.s32.totalorder %s184, %s198
      %p200 = scmp.eq.s32.totalorder %s27, 0
      %p201 = por %p199, %p200
      %s203 = sadd.s32 %s202, 1
      %p206 = scmp.eq.s32.totalorder %s21, 1
      %p207 = scmp.ne.s32.totalorder %s202, %s204
      %p208 = scmp.eq.s32.totalorder %s21, 0
      %p209 = por %p207, %p208
      %p210 = scmp.ne.s32.totalorder %s202, %s204
      %p211 = scmp.eq.s32.totalorder %s26, 1
      %p212 = por %p210, %p211
      %p213 = scmp.ne.s32.totalorder %s204, %s205
      %p214 = scmp.eq.s32.totalorder %s26, 0
      %p215 = por %p213, %p214
      %p216 = scmp.ne.s32.totalorder %s204, %s205
      %p217 = scmp.eq.s32.totalorder %s27, 1
      %p218 = por %p216, %p217
      %p220 = scmp.ne.s32.totalorder %s205, %s219
      %p221 = scmp.eq.s32.totalorder %s27, 0
      %p222 = por %p220, %p221
      %s224 = sadd.s32 %s223, 1
      %p227 = scmp.eq.s32.totalorder %s21, 1
      %p228 = scmp.ne.s32.totalorder %s223, %s225
      %p229 = scmp.eq.s32.totalorder %s21, 0
      %p230 = por %p228, %p229
      %p231 = scmp.ne.s32.totalorder %s223, %s225
      %p232 = scmp.eq.s32.totalorder %s26, 1
      %p233 = por %p231, %p232
      %p234 = scmp.ne.s32.totalorder %s225, %s226
      %p235 = scmp.eq.s32.totalorder %s26, 0
      %p236 = por %p234, %p235
      %p237 = scmp.ne.s32.totalorder %s225, %s226
      %p238 = scmp.eq.s32.totalorder %s27, 1
      %p239 = por %p237, %p238
      %p241 = scmp.ne.s32.totalorder %s226, %s240
      %p242 = scmp.eq.s32.totalorder %s27, 0
      %p243 = por %p241, %p242
      %s245 = sadd.s32 %s244, 1
      %p248 = scmp.eq.s32.totalorder %s21, 1
      %p249 = scmp.ne.s32.totalorder %s244, %s246
      %p250 = scmp.eq.s32.totalorder %s21, 0
      %p251 = por %p249, %p250
      %p252 = scmp.ne.s32.totalorder %s244, %s246
      %p253 = scmp.eq.s32.totalorder %s26, 1
      %p254 = por %p252, %p253
      %p255 = scmp.ne.s32.totalorder %s246, %s247
      %p256 = scmp.eq.s32.totalorder %s26, 0
      %p257 = por %p255, %p256
      %p258 = scmp.ne.s32.totalorder %s246, %s247
      %p259 = scmp.eq.s32.totalorder %s27, 1
      %p260 = por %p258, %p259
      %p262 = scmp.ne.s32.totalorder %s247, %s261
      %p263 = scmp.eq.s32.totalorder %s27, 0
      %p264 = por %p262, %p263
      %s266 = sadd.s32 %s265, 1
      %p269 = scmp.eq.s32.totalorder %s21, 1
      %p270 = scmp.ne.s32.totalorder %s265, %s267
      %p271 = scmp.eq.s32.totalorder %s21, 0
      %p272 = por %p270, %p271
      %p273 = scmp.ne.s32.totalorder %s265, %s267
      %p274 = scmp.eq.s32.totalorder %s26, 1
      %p275 = por %p273, %p274
      %p276 = scmp.ne.s32.totalorder %s267, %s268
      %p277 = scmp.eq.s32.totalorder %s26, 0
      %p278 = por %p276, %p277
      %p279 = scmp.ne.s32.totalorder %s267, %s268
      %p280 = scmp.eq.s32.totalorder %s27, 1
      %p281 = por %p279, %p280
      %p283 = scmp.ne.s32.totalorder %s268, %s282
      %p284 = scmp.eq.s32.totalorder %s27, 0
      %p285 = por %p283, %p284
      %s287 = sadd.s32 %s286, 1
      %p290 = scmp.eq.s32.totalorder %s21, 1
      %p291 = scmp.ne.s32.totalorder %s286, %s288
      %p292 = scmp.eq.s32.totalorder %s21, 0
      %p293 = por %p291, %p292
      %p294 = scmp.ne.s32.totalorder %s286, %s288
      %p295 = scmp.eq.s32.totalorder %s26, 1
      %p296 = por %p294, %p295
      %p297 = scmp.ne.s32.totalorder %s288, %s289
      %p298 = scmp.eq.s32.totalorder %s26, 0
      %p299 = por %p297, %p298
      %p300 = scmp.ne.s32.totalorder %s288, %s289
      %p301 = scmp.eq.s32.totalorder %s27, 1
      %p302 = por %p300, %p301
      %p304 = scmp.ne.s32.totalorder %s289, %s303
      %p305 = scmp.eq.s32.totalorder %s27, 0
      %p306 = por %p304, %p305
      %s308 = sadd.s32 %s307, 1
      %p311 = scmp.eq.s32.totalorder %s21, 1
      %p312 = scmp.ne.s32.totalorder %s307, %s309
      %p313 = scmp.eq.s32.totalorder %s21, 0
      %p314 = por %p312, %p313
      %p315 = scmp.ne.s32.totalorder %s307, %s309
      %p316 = scmp.eq.s32.totalorder %s26, 1
      %p317 = por %p315, %p316
      %p318 = scmp.ne.s32.totalorder %s309, %s310
      %p319 = scmp.eq.s32.totalorder %s26, 0
      %p320 = por %p318, %p319
      %p321 = scmp.ne.s32.totalorder %s309, %s310
      %p322 = scmp.eq.s32.totalorder %s27, 1
      %p323 = por %p321, %p322
      %p325 = scmp.ne.s32.totalorder %s310, %s324
      %p326 = scmp.eq.s32.totalorder %s27, 0
      %p327 = por %p325, %p326
      %p328 = scmp.le.s32.totalorder 1, %s21
      %p329 = scmp.lt.s32.totalorder %s21, 3
      %p330 = pnand %p328, %p329
      %p331 = pneg %p330
      // Predicated region
      $region9: #{tpu_custom_call.1} parent=5 // pred_check
        _
      $region10: #{tpu_custom_call.1} parent=5 // pred_check_branch
        %333 = sbr.rel (%p330) target = $region12
      $region11: #{tpu_custom_call.1} parent=5 // pred_region
        %s334 = ssub.s32 %s21, 1
        // Predicated region
        $region13: #{tpu_custom_call.1} parent=11 // pred_check
          %p335 = pneg %p68
        $region14: #{tpu_custom_call.1} parent=11 // pred_check_branch
          %337 = sbr.rel (%p335) target = $region16
        $region15: #{tpu_custom_call.1} parent=11 // pred_region
          _
        $region16: #{tpu_custom_call.1} parent=11 // pred_fallthru
          _
        // Predicated region
        $region17: #{tpu_custom_call.1} parent=11 // pred_check
          %p338 = pneg %p89
        $region18: #{tpu_custom_call.1} parent=11 // pred_check_branch
          %340 = sbr.rel (%p338) target = $region20
        $region19: #{tpu_custom_call.1} parent=11 // pred_region
          _
        $region20: #{tpu_custom_call.1} parent=11 // pred_fallthru
          _
        // Predicated region
        $region21: #{tpu_custom_call.1} parent=11 // pred_check
          %p341 = pneg %p110
        $region22: #{tpu_custom_call.1} parent=11 // pred_check_branch
          %343 = sbr.rel (%p341) target = $region24
        $region23: #{tpu_custom_call.1} parent=11 // pred_region
          _
        $region24: #{tpu_custom_call.1} parent=11 // pred_fallthru
          _
        // Predicated region
        $region25: #{tpu_custom_call.1} parent=11 // pred_check
          %p344 = pneg %p131
        $region26: #{tpu_custom_call.1} parent=11 // pred_check_branch
          %346 = sbr.rel (%p344) target = $region28
        $region27: #{tpu_custom_call.1} parent=11 // pred_region
          _
        $region28: #{tpu_custom_call.1} parent=11 // pred_fallthru
          _
        // Predicated region
        $region29: #{tpu_custom_call.1} parent=11 // pred_check
          %p347 = pneg %p152
        $region30: #{tpu_custom_call.1} parent=11 // pred_check_branch
          %349 = sbr.rel (%p347) target = $region32
        $region31: #{tpu_custom_call.1} parent=11 // pred_region
          _
        $region32: #{tpu_custom_call.1} parent=11 // pred_fallthru
          _
        // Predicated region
        $region33: #{tpu_custom_call.1} parent=11 // pred_check
          %p350 = pneg %p173
        $region34: #{tpu_custom_call.1} parent=11 // pred_check_branch
          %352 = sbr.rel (%p350) target = $region36
        $region35: #{tpu_custom_call.1} parent=11 // pred_region
          _
        $region36: #{tpu_custom_call.1} parent=11 // pred_fallthru
          _
        // Predicated region
        $region37: #{tpu_custom_call.1} parent=11 // pred_check
          %p353 = pneg %p194
        $region38: #{tpu_custom_call.1} parent=11 // pred_check_branch
          %355 = sbr.rel (%p353) target = $region40
        $region39: #{tpu_custom_call.1} parent=11 // pred_region
          _
        $region40: #{tpu_custom_call.1} parent=11 // pred_fallthru
          _
        // Predicated region
        $region41: #{tpu_custom_call.1} parent=11 // pred_check
          %p356 = pneg %p215
        $region42: #{tpu_custom_call.1} parent=11 // pred_check_branch
          %358 = sbr.rel (%p356) target = $region44
        $region43: #{tpu_custom_call.1} parent=11 // pred_region
          _
        $region44: #{tpu_custom_call.1} parent=11 // pred_fallthru
          _
        // Predicated region
        $region45: #{tpu_custom_call.1} parent=11 // pred_check
          %p359 = pneg %p236
        $region46: #{tpu_custom_call.1} parent=11 // pred_check_branch
          %361 = sbr.rel (%p359) target = $region48
        $region47: #{tpu_custom_call.1} parent=11 // pred_region
          _
        $region48: #{tpu_custom_call.1} parent=11 // pred_fallthru
          _
        // Predicated region
        $region49: #{tpu_custom_call.1} parent=11 // pred_check
          %p362 = pneg %p257
        $region50: #{tpu_custom_call.1} parent=11 // pred_check_branch
          %364 = sbr.rel (%p362) target = $region52
        $region51: #{tpu_custom_call.1} parent=11 // pred_region
          _
        $region52: #{tpu_custom_call.1} parent=11 // pred_fallthru
          _
        // Predicated region
        $region53: #{tpu_custom_call.1} parent=11 // pred_check
          %p365 = pneg %p278
        $region54: #{tpu_custom_call.1} parent=11 // pred_check_branch
          %367 = sbr.rel (%p365) target = $region56
        $region55: #{tpu_custom_call.1} parent=11 // pred_region
          _
        $region56: #{tpu_custom_call.1} parent=11 // pred_fallthru
          _
        // Predicated region
        $region57: #{tpu_custom_call.1} parent=11 // pred_check
          %p368 = pneg %p299
        $region58: #{tpu_custom_call.1} parent=11 // pred_check_branch
          %370 = sbr.rel (%p368) target = $region60
        $region59: #{tpu_custom_call.1} parent=11 // pred_region
          _
        $region60: #{tpu_custom_call.1} parent=11 // pred_fallthru
          _
      $region12: #{tpu_custom_call.1} parent=5 // pred_fallthru
        _
      %p371 = scmp.lt.s32.totalorder %s21, 2
      // Predicated region
      $region61: #{tpu_custom_call.1} parent=5 // pred_check
        %p372 = pneg %p371
      $region62: #{tpu_custom_call.1} parent=5 // pred_check_branch
        %374 = sbr.rel (%p372) target = $region64
      $region63: #{tpu_custom_call.1} parent=5 // pred_region
        // Predicated region
        $region65: #{tpu_custom_call.1} parent=63 // pred_check
          %p375 = pneg %p41
        $region66: #{tpu_custom_call.1} parent=63 // pred_check_branch
          %377 = sbr.rel (%p375) target = $region68
        $region67: #{tpu_custom_call.1} parent=63 // pred_region
          %s378 = sand.u32 %s31, 1
          %s379 = sand.u32 %s31, 1
          %s380 = smul.addr %s379, 16
          %s381 = scalar_lea.vmem [#allocation4], %s380
          %s382 = smul.addr %s21, 8
          %s383 = scalar_lea.vmem %s0, %s382
          // Predicated region
          $region69: #{tpu_custom_call.1} parent=67 // pred_check
            _
          $region70: #{tpu_custom_call.1} parent=67 // pred_check_branch
            %385 = sbr.rel (0) target = $region72
          $region71: #{tpu_custom_call.1} parent=67 // pred_region
            // Predicated region
            $region73: #{tpu_custom_call.1} parent=71 // pred_check
              _
            $region74: #{tpu_custom_call.1} parent=71 // pred_check_branch
              %387 = sbr.rel (0) target = $region76
            $region75: #{tpu_custom_call.1} parent=71 // pred_region
              // Predicated region
              $region88: #{tpu_custom_call.1} parent=75 // pred_check
                _
              $region89: #{tpu_custom_call.1} parent=75 // pred_check_branch
                %405 = sbr.rel (0) target = $region91
              $region90: #{tpu_custom_call.1} parent=75 // pred_region
                loop: start=0, step=1, limit=1
                $region92: #{tpu_custom_call.1} parent=90 // loop_pre_header
                  _
                $region93: #{tpu_custom_call.1} parent=90 // loop_header
                  %s407 = sphi 0, %s411
                  %p408 = scmp.ge.s32.totalorder %s407, 1
                  %s412 = sphi %s383, %s383
                  %s413 = sphi %s381, %s381
                $region94: #{tpu_custom_call.1} parent=90 // loop_header_branch
                  %410 = sbr.rel (%p408) target = $region98
                $region95: #{tpu_custom_call.1} parent=90 // loop_body
                  %v414 = vld [vmem:[%s412] sm:$0xff]
                  %415 = vst [vmem:[%s413] sm:$0xff] %v414
                  %v416 = vld [vmem:[%s412 + $0x10] sm:$0xff]
                  %417 = vst [vmem:[%s413 + $0x8] sm:$0xff] %v416
                $region96: #{tpu_custom_call.1} parent=90 // loop_footer
                  %s411 = sadd.s32 1, %s407
                $region97: #{tpu_custom_call.1} parent=90 // loop_footer_branch
                  %406 = sbr.rel target = $region93
                $region98: #{tpu_custom_call.1} parent=90 // loop_exit
                  _
              $region91: #{tpu_custom_call.1} parent=75 // pred_fallthru
                _
              // Predicated region
              $region99: #{tpu_custom_call.1} parent=75 // pred_check
                _
              $region100: #{tpu_custom_call.1} parent=75 // pred_check_branch
                %419 = sbr.rel target = $region102
              $region101: #{tpu_custom_call.1} parent=75 // pred_region
                _
              $region102: #{tpu_custom_call.1} parent=75 // pred_fallthru
                _
            $region76: #{tpu_custom_call.1} parent=71 // pred_fallthru
              _
            // Predicated region
            $region77: #{tpu_custom_call.1} parent=71 // pred_check
              _
            $region78: #{tpu_custom_call.1} parent=71 // pred_check_branch
              %389 = sbr.rel target = $region80
            $region79: #{tpu_custom_call.1} parent=71 // pred_region
              %s391 = ssub.s32 256, 1
              loop: start=0, step=1, limit=1
              $region81: #{tpu_custom_call.1} parent=79 // loop_pre_header
                _
              $region82: #{tpu_custom_call.1} parent=79 // loop_header
                %s393 = sphi 0, %s397
                %p394 = scmp.ge.s32.totalorder %s393, 1
                %s398 = sphi %s383, %s383
                %s399 = sphi %s381, %s381
              $region83: #{tpu_custom_call.1} parent=79 // loop_header_branch
                %396 = sbr.rel (%p394) target = $region87
              $region84: #{tpu_custom_call.1} parent=79 // loop_body
                %v400 = vld [vmem:[%s398] sm:%s391]
                %401 = vst [vmem:[%s399] sm:%s391] %v400
                %v402 = vld [vmem:[%s398 + $0x10] sm:%s391]
                %403 = vst [vmem:[%s399 + $0x8] sm:%s391] %v402
              $region85: #{tpu_custom_call.1} parent=79 // loop_footer
                %s397 = sadd.s32 1, %s393
              $region86: #{tpu_custom_call.1} parent=79 // loop_footer_branch
                %392 = sbr.rel target = $region82
              $region87: #{tpu_custom_call.1} parent=79 // loop_exit
                _
            $region80: #{tpu_custom_call.1} parent=71 // pred_fallthru
              _
          $region72: #{tpu_custom_call.1} parent=67 // pred_fallthru
            _
          %420 = vnop
        $region68: #{tpu_custom_call.1} parent=63 // pred_fallthru
          _
      $region64: #{tpu_custom_call.1} parent=5 // pred_fallthru
        _
      %p421 = scmp.le.s32.totalorder 1, %s21
      %p422 = scmp.lt.s32.totalorder %s21, 3
      %p423 = pnand %p421, %p422
      %p424 = pneg %p423
      // Predicated region
      $region103: #{tpu_custom_call.1} parent=5 // pred_check
        _
      $region104: #{tpu_custom_call.1} parent=5 // pred_check_branch
        %426 = sbr.rel (%p423) target = $region106
      $region105: #{tpu_custom_call.1} parent=5 // pred_region
        %s427 = ssub.s32 %s21, 1
        %s428 = sand.u32 %s34, 1
        %s429 = sand.u32 %s34, 1
        %s430 = smul.addr %s429, 16
        %s431 = scalar_lea.vmem [#allocation4], %s430
        // Predicated region
        $region107: #{tpu_custom_call.1} parent=105 // pred_check
          %p432 = pneg %p47
        $region108: #{tpu_custom_call.1} parent=105 // pred_check_branch
          %434 = sbr.rel (%p432) target = $region110
        $region109: #{tpu_custom_call.1} parent=105 // pred_region
          _
        $region110: #{tpu_custom_call.1} parent=105 // pred_fallthru
          _
        %s435 = sand.u32 %s34, 1
        %s436 = sand.u32 %s34, 1
        %s437 = smul.addr %s436, 16
        %s438 = scalar_lea.vmem [#allocation4], %s437
        %p439 = pneg %p47
        %p440 = pneg %p44
        %p441 = pneg %p68
        %p442 = pneg %p65
        %p443 = pneg %p89
        %p444 = pneg %p86
        %p445 = pneg %p110
        %p446 = pneg %p107
        %p447 = pneg %p131
        %p448 = pneg %p128
        %p449 = pneg %p152
        %p450 = pneg %p149
        %p451 = pneg %p173
        %p452 = pneg %p170
        %p453 = pneg %p194
        %p454 = pneg %p191
        %p455 = pneg %p215
        %p456 = pneg %p212
        %p457 = pneg %p236
        %p458 = pneg %p233
        %p459 = pneg %p257
        %p460 = pneg %p254
        %p461 = pneg %p278
        %p462 = pneg %p275
        %p463 = pneg %p299
        %p464 = pneg %p296
        %p465 = pneg %p320
        %p466 = pneg %p317
        %p467 = scmp.eq.s32.totalorder %s26, 0
        // Predicated region
        $region111: #{tpu_custom_call.1} parent=105 // pred_check
          %p468 = pneg %p467
        $region112: #{tpu_custom_call.1} parent=105 // pred_check_branch
          %470 = sbr.rel (%p468) target = $region114
        $region113: #{tpu_custom_call.1} parent=105 // pred_region
          %471 = vst [vmem:[#allocation2] sm:$0xff] 0.0
          %472 = vst [vmem:[#allocation2 + $0x8] sm:$0xff] 0.0
        $region114: #{tpu_custom_call.1} parent=105 // pred_fallthru
          _
        %v473 = vld [vmem:[%s431] sm:$0xff]
        %v474 = vld [vmem:[%s431 + $0x8] sm:$0xff]
        %v475 = vld [vmem:[#allocation2] sm:$0xff]
        %v476 = vld [vmem:[#allocation2 + $0x8] sm:$0xff]
        %v477 = vadd.f32 %v475, %v473
        %v478 = vadd.f32 %v476, %v474
        %479 = vst [vmem:[#allocation2] sm:$0xff] %v477
        %480 = vst [vmem:[#allocation2 + $0x8] sm:$0xff] %v478
        %p481 = scmp.eq.s32.totalorder %s26, 1
        // Predicated region
        $region115: #{tpu_custom_call.1} parent=105 // pred_check
          %p482 = pneg %p481
        $region116: #{tpu_custom_call.1} parent=105 // pred_check_branch
          %484 = sbr.rel (%p482) target = $region118
        $region117: #{tpu_custom_call.1} parent=105 // pred_region
          %v485 = vld [vmem:[%s8] sm:$0x1]
          %v486 = vld [vmem:[#allocation2] sm:$0xff]
          %v487 = vld [vmem:[#allocation2 + $0x8] sm:$0xff]
          %488 = vadd.xlane.f32.xlu0 %v486
          %v489 = vpop.xlane.xlu0 %488
          %490 = vadd.xlane.f32.xlu0 %v487
          %v491 = vpop.xlane.xlu0 %490
          %v492 = vmul.f32 %v489, 0.00390625
          %v493 = vmul.f32 %v491, 0.00390625
          %v494 = vld [vmem:[%s4] sm:$0xff]
          %v497 = vlaneseq
          %v498 = vand.u32 %v497, 127
          %v499 = vlaneseq
          %v500 = vshrl.u32 %v499, 7
          %v501 = vsub.s32 %v498, %v500
          %v502 = vrot.slane %v492, %v501
          %v503 = vlaneseq
          %v504 = vshrl.u32 %v503, 7
          %v505 = vsub.s32 %v498, %v504
          %v506 = vrot.slane %v493, %v505
          %vm507 = vcmask 1041409
          %v508 = vsel %vm507, %v506, %v502
          %vm509 = vcmask 64512
          %v510 = vsel %vm509, %v508, 0
          %512 = vmatprep.subr.mxu0 0.0
          %513 = vmatpush1.msra.mxu0 0.0
          %514 = vmatprep.subr.mxu0 0.0
          %515 = vmatpush1.msra.mxu0 0.0
          %516 = vmatprep.subr.mxu0 0.0
          %517 = vmatpush1.msra.mxu0 0.0
          %518 = vmatprep.subr.mxu0 0.0
          %519 = vmatpush1.msra.mxu0 0.0
          %520 = vmatprep.subr.mxu0 0.0
          %521 = vmatpush1.msra.mxu0 0.0
          %522 = vmatprep.subr.mxu0 0.0
          %523 = vmatpush1.msra.mxu0 0.0
          %524 = vmatprep.subr.mxu0 0.0
          %525 = vmatpush1.msra.mxu0 0.0
          %526 = vmatprep.subr.mxu0 0.0
          %527 = vmatpush1.msra.mxu0 0.0
          %528 = vmatprep.subr.mxu0 0.0
          %529 = vmatpush1.msra.mxu0 0.0
          %530 = vmatprep.subr.mxu0 0.0
          %531 = vmatpush1.msra.mxu0 0.0
          %532 = vmatprep.subr.mxu0 0.0
          %533 = vmatpush1.msra.mxu0 0.0
          %534 = vmatprep.subr.mxu0 0.0
          %535 = vmatpush1.msra.mxu0 0.0
          %536 = vmatprep.subr.mxu0 0.0
          %537 = vmatpush1.msra.mxu0 0.0
          %538 = vmatprep.subr.mxu0 0.0
          %539 = vmatpush1.msra.mxu0 0.0
          %540 = vmatprep.subr.mxu0 0.0
          %541 = vmatpush1.msra.mxu0 0.0
          %542 = vmatprep.subr.mxu0 0.0
          %543 = vmatpush1.msra.mxu0 %v494
          %544 = vmatprep.subr.mxu0 0.0
          %545 = vmatpush2.msra.mxu0 0.0
          %546 = vmatprep.subr.mxu0 0.0
          %547 = vmatpush2.msra.mxu0 0.0
          %548 = vmatprep.subr.mxu0 0.0
          %549 = vmatpush2.msra.mxu0 0.0
          %550 = vmatprep.subr.mxu0 0.0
          %551 = vmatpush2.msra.mxu0 0.0
          %552 = vmatprep.subr.mxu0 0.0
          %553 = vmatpush2.msra.mxu0 0.0
          %554 = vmatprep.subr.mxu0 0.0
          %555 = vmatpush2.msra.mxu0 0.0
          %556 = vmatprep.subr.mxu0 0.0
          %557 = vmatpush2.msra.mxu0 0.0
          %558 = vmatprep.subr.mxu0 0.0
          %559 = vmatpush2.msra.mxu0 0.0
          %560 = vmatprep.subr.mxu0 0.0
          %561 = vmatpush2.msra.mxu0 0.0
          %562 = vmatprep.subr.mxu0 0.0
          %563 = vmatpush2.msra.mxu0 0.0
          %564 = vmatprep.subr.mxu0 0.0
          %565 = vmatpush2.msra.mxu0 0.0
          %566 = vmatprep.subr.mxu0 0.0
          %567 = vmatpush2.msra.mxu0 0.0
          %568 = vmatprep.subr.mxu0 0.0
          %569 = vmatpush2.msra.mxu0 0.0
          %570 = vmatprep.subr.mxu0 0.0
          %571 = vmatpush2.msra.mxu0 0.0
          %572 = vmatprep.subr.mxu0 0.0
          %573 = vmatpush2.msra.mxu0 0.0
          %574 = vmatprep.subr.mxu0 0.0
          %575 = vmatpush2.msra.mxu0 0.0
          %576 = vmatprep.mubr.f32.mxu0 0.0
          %577 = vmatmul.mubr.f32.gmra.mxu0 %v510
          %v578 = vpop.f32.mrf.mxu0
          %v579 = vadd.f32 0.0, %v578
          %v580 = vpop.f32.mrf.mxu0
          %581 = vdwg.mxu0
          %v583 = vlaneseq
          %v584 = vshrl.u32 %v583, 7
          %v585 = vsub.s32 0, %v584
          %v586 = vrot.slane %v485, %v585
          %v588 = vadd.f32 %v586, %v579
          %v589 = vld [vmem:[%s1] sm:$0xff]
          %v590 = vld [vmem:[%s1 + $0x8] sm:$0xff]
          %v591 = vld [vmem:[%s1 + $0x10] sm:$0xff]
          %v592 = vld [vmem:[%s1 + $0x18] sm:$0xff]
          %vm593 = vcmask 523264
          %v594 = vsel %vm593, %v589, 0.0
          %595 = vadd.xlane.f32.xlu0 %v594
          %v596 = vpop.xlane.xlu0 %595
          %v597 = vsel %vm593, %v590, 0.0
          %598 = vadd.xlane.f32.xlu0 %v597
          %v599 = vpop.xlane.xlu0 %598
          %v600 = vsel %vm593, %v591, 0.0
          %601 = vadd.xlane.f32.xlu0 %v600
          %v602 = vpop.xlane.xlu0 %601
          %v603 = vsel %vm593, %v592, 0.0
          %604 = vadd.xlane.f32.xlu0 %v603
          %v605 = vpop.xlane.xlu0 %604
          %v606 = vmul.f32 %v596, 0.015625
          %v607 = vmul.f32 %v599, 0.015625
          %v608 = vmul.f32 %v602, 0.015625
          %v609 = vmul.f32 %v605, 0.015625
          %v610 = vld [vmem:[%s5] sm:$0xff]
          %v611 = vld [vmem:[%s5 + $0x8] sm:$0xff]
          %v616 = vlaneseq
          %v617 = vshrl.u32 %v616, 7
          %v618 = vsub.s32 %v498, %v617
          %v619 = vrot.slane %v606, %v618
          %v620 = vadd.s32 %v498, 4294967288
          %v621 = vlaneseq
          %v622 = vshrl.u32 %v621, 7
          %v623 = vsub.s32 %v620, %v622
          %v624 = vrot.slane %v607, %v623
          %vm625 = vcmask 130112
          %v626 = vsel %vm625, %v624, %v619
          %v627 = vlaneseq
          %v628 = vshrl.u32 %v627, 7
          %v629 = vsub.s32 %v498, %v628
          %v630 = vrot.slane %v608, %v629
          %v631 = vlaneseq
          %v632 = vshrl.u32 %v631, 7
          %v633 = vsub.s32 %v620, %v632
          %v634 = vrot.slane %v609, %v633
          %v635 = vsel %vm625, %v634, %v630
          %v636 = vsel %vm507, %v635, %v626
          %vm637 = vcmask 130048
          %v638 = vsel %vm637, %v636, 0
          %640 = vmatprep.subr.mxu0 0.0
          %641 = vmatpush1.msra.mxu0 0.0
          %642 = vmatprep.subr.mxu0 0.0
          %643 = vmatpush1.msra.mxu0 0.0
          %644 = vmatprep.subr.mxu0 0.0
          %645 = vmatpush1.msra.mxu0 0.0
          %646 = vmatprep.subr.mxu0 0.0
          %647 = vmatpush1.msra.mxu0 0.0
          %648 = vmatprep.subr.mxu0 0.0
          %649 = vmatpush1.msra.mxu0 0.0
          %650 = vmatprep.subr.mxu0 0.0
          %651 = vmatpush1.msra.mxu0 0.0
          %652 = vmatprep.subr.mxu0 0.0
          %653 = vmatpush1.msra.mxu0 0.0
          %654 = vmatprep.subr.mxu0 0.0
          %655 = vmatpush1.msra.mxu0 0.0
          %656 = vmatprep.subr.mxu0 0.0
          %657 = vmatpush1.msra.mxu0 0.0
          %658 = vmatprep.subr.mxu0 0.0
          %659 = vmatpush1.msra.mxu0 0.0
          %660 = vmatprep.subr.mxu0 0.0
          %661 = vmatpush1.msra.mxu0 0.0
          %662 = vmatprep.subr.mxu0 0.0
          %663 = vmatpush1.msra.mxu0 0.0
          %664 = vmatprep.subr.mxu0 0.0
          %665 = vmatpush1.msra.mxu0 0.0
          %666 = vmatprep.subr.mxu0 0.0
          %667 = vmatpush1.msra.mxu0 0.0
          %668 = vmatprep.subr.mxu0 0.0
          %669 = vmatpush1.msra.mxu0 %v611
          %670 = vmatprep.subr.mxu0 0.0
          %671 = vmatpush1.msra.mxu0 %v610
          %672 = vmatprep.subr.mxu0 0.0
          %673 = vmatpush2.msra.mxu0 0.0
          %674 = vmatprep.subr.mxu0 0.0
          %675 = vmatpush2.msra.mxu0 0.0
          %676 = vmatprep.subr.mxu0 0.0
          %677 = vmatpush2.msra.mxu0 0.0
          %678 = vmatprep.subr.mxu0 0.0
          %679 = vmatpush2.msra.mxu0 0.0
          %680 = vmatprep.subr.mxu0 0.0
          %681 = vmatpush2.msra.mxu0 0.0
          %682 = vmatprep.subr.mxu0 0.0
          %683 = vmatpush2.msra.mxu0 0.0
          %684 = vmatprep.subr.mxu0 0.0
          %685 = vmatpush2.msra.mxu0 0.0
          %686 = vmatprep.subr.mxu0 0.0
          %687 = vmatpush2.msra.mxu0 0.0
          %688 = vmatprep.subr.mxu0 0.0
          %689 = vmatpush2.msra.mxu0 0.0
          %690 = vmatprep.subr.mxu0 0.0
          %691 = vmatpush2.msra.mxu0 0.0
          %692 = vmatprep.subr.mxu0 0.0
          %693 = vmatpush2.msra.mxu0 0.0
          %694 = vmatprep.subr.mxu0 0.0
          %695 = vmatpush2.msra.mxu0 0.0
          %696 = vmatprep.subr.mxu0 0.0
          %697 = vmatpush2.msra.mxu0 0.0
          %698 = vmatprep.subr.mxu0 0.0
          %699 = vmatpush2.msra.mxu0 0.0
          %700 = vmatprep.subr.mxu0 0.0
          %701 = vmatpush2.msra.mxu0 0.0
          %702 = vmatprep.subr.mxu0 0.0
          %703 = vmatpush2.msra.mxu0 0.0
          %704 = vmatprep.mubr.f32.mxu0 0.0
          %705 = vmatmul.mubr.f32.gmra.mxu0 %v638
          %v706 = vpop.f32.mrf.mxu0
          %v707 = vadd.f32 0.0, %v706
          %v708 = vpop.f32.mrf.mxu0
          %709 = vdwg.mxu0
          %v710 = vadd.f32 %v588, %v707
          %v711 = vld [vmem:[%s2] sm:$0xff]
          %v712 = vld [vmem:[%s2 + $0x8] sm:$0xff]
          %v713 = vld [vmem:[%s2 + $0x10] sm:$0xff]
          %v714 = vld [vmem:[%s2 + $0x18] sm:$0xff]
          %v715 = vld [vmem:[%s2 + $0x20] sm:$0xff]
          %v716 = vld [vmem:[%s2 + $0x28] sm:$0xff]
          %v717 = vld [vmem:[%s2 + $0x30] sm:$0xff]
          %v718 = vld [vmem:[%s2 + $0x38] sm:$0xff]
          %v719 = vsel %vm637, %v711, 0.0
          %720 = vadd.xlane.f32.xlu0 %v719
          %v721 = vpop.xlane.xlu0 %720
          %v722 = vsel %vm637, %v712, 0.0
          %723 = vadd.xlane.f32.xlu0 %v722
          %v724 = vpop.xlane.xlu0 %723
          %v725 = vsel %vm637, %v713, 0.0
          %726 = vadd.xlane.f32.xlu0 %v725
          %v727 = vpop.xlane.xlu0 %726
          %v728 = vsel %vm637, %v714, 0.0
          %729 = vadd.xlane.f32.xlu0 %v728
          %v730 = vpop.xlane.xlu0 %729
          %v731 = vsel %vm637, %v715, 0.0
          %732 = vadd.xlane.f32.xlu0 %v731
          %v733 = vpop.xlane.xlu0 %732
          %v734 = vsel %vm637, %v716, 0.0
          %735 = vadd.xlane.f32.xlu0 %v734
          %v736 = vpop.xlane.xlu0 %735
          %v737 = vsel %vm637, %v717, 0.0
          %738 = vadd.xlane.f32.xlu0 %v737
          %v739 = vpop.xlane.xlu0 %738
          %v740 = vsel %vm637, %v718, 0.0
          %741 = vadd.xlane.f32.xlu0 %v740
          %v742 = vpop.xlane.xlu0 %741
          %v743 = vmul.f32 %v721, 0.0625
          %v744 = vmul.f32 %v724, 0.0625
          %v745 = vmul.f32 %v727, 0.0625
          %v746 = vmul.f32 %v730, 0.0625
          %v747 = vmul.f32 %v733, 0.0625
          %v748 = vmul.f32 %v736, 0.0625
          %v749 = vmul.f32 %v739, 0.0625
          %v750 = vmul.f32 %v742, 0.0625
          %v751 = vld [vmem:[%s6] sm:$0xff]
          %v752 = vld [vmem:[%s6 + $0x8] sm:$0xff]
          %v753 = vld [vmem:[%s6 + $0x10] sm:$0xff]
          %v754 = vld [vmem:[%s6 + $0x18] sm:$0xff]
          %v763 = vlaneseq
          %v764 = vshrl.u32 %v763, 7
          %v765 = vsub.s32 %v498, %v764
          %v766 = vrot.slane %v743, %v765
          %v767 = vlaneseq
          %v768 = vshrl.u32 %v767, 7
          %v769 = vsub.s32 %v620, %v768
          %v770 = vrot.slane %v744, %v769
          %v771 = vsel %vm625, %v770, %v766
          %v772 = vadd.s32 %v498, 4294967280
          %v773 = vlaneseq
          %v774 = vshrl.u32 %v773, 7
          %v775 = vsub.s32 %v772, %v774
          %v776 = vrot.slane %v745, %v775
          %vm777 = vcmask 195712
          %v778 = vsel %vm777, %v776, %v771
          %v779 = vadd.s32 %v498, 4294967272
          %v780 = vlaneseq
          %v781 = vshrl.u32 %v780, 7
          %v782 = vsub.s32 %v779, %v781
          %v783 = vrot.slane %v746, %v782
          %vm784 = vcmask 261312
          %v785 = vsel %vm784, %v783, %v778
          %v786 = vlaneseq
          %v787 = vshrl.u32 %v786, 7
          %v788 = vsub.s32 %v498, %v787
          %v789 = vrot.slane %v747, %v788
          %v790 = vlaneseq
          %v791 = vshrl.u32 %v790, 7
          %v792 = vsub.s32 %v620, %v791
          %v793 = vrot.slane %v748, %v792
          %v794 = vsel %vm625, %v793, %v789
          %v795 = vlaneseq
          %v796 = vshrl.u32 %v795, 7
          %v797 = vsub.s32 %v772, %v796
          %v798 = vrot.slane %v749, %v797
          %v799 = vsel %vm777, %v798, %v794
          %v800 = vlaneseq
          %v801 = vshrl.u32 %v800, 7
          %v802 = vsub.s32 %v779, %v801
          %v803 = vrot.slane %v750, %v802
          %v804 = vsel %vm784, %v803, %v799
          %v805 = vsel %vm507, %v804, %v785
          %vm806 = vcmask 261120
          %v807 = vsel %vm806, %v805, 0
          %809 = vmatprep.subr.mxu0 0.0
          %810 = vmatpush1.msra.mxu0 0.0
          %811 = vmatprep.subr.mxu0 0.0
          %812 = vmatpush1.msra.mxu0 0.0
          %813 = vmatprep.subr.mxu0 0.0
          %814 = vmatpush1.msra.mxu0 0.0
          %815 = vmatprep.subr.mxu0 0.0
          %816 = vmatpush1.msra.mxu0 0.0
          %817 = vmatprep.subr.mxu0 0.0
          %818 = vmatpush1.msra.mxu0 0.0
          %819 = vmatprep.subr.mxu0 0.0
          %820 = vmatpush1.msra.mxu0 0.0
          %821 = vmatprep.subr.mxu0 0.0
          %822 = vmatpush1.msra.mxu0 0.0
          %823 = vmatprep.subr.mxu0 0.0
          %824 = vmatpush1.msra.mxu0 0.0
          %825 = vmatprep.subr.mxu0 0.0
          %826 = vmatpush1.msra.mxu0 0.0
          %827 = vmatprep.subr.mxu0 0.0
          %828 = vmatpush1.msra.mxu0 0.0
          %829 = vmatprep.subr.mxu0 0.0
          %830 = vmatpush1.msra.mxu0 0.0
          %831 = vmatprep.subr.mxu0 0.0
          %832 = vmatpush1.msra.mxu0 0.0
          %833 = vmatprep.subr.mxu0 0.0
          %834 = vmatpush1.msra.mxu0 %v754
          %835 = vmatprep.subr.mxu0 0.0
          %836 = vmatpush1.msra.mxu0 %v753
          %837 = vmatprep.subr.mxu0 0.0
          %838 = vmatpush1.msra.mxu0 %v752
          %839 = vmatprep.subr.mxu0 0.0
          %840 = vmatpush1.msra.mxu0 %v751
          %841 = vmatprep.subr.mxu0 0.0
          %842 = vmatpush2.msra.mxu0 0.0
          %843 = vmatprep.subr.mxu0 0.0
          %844 = vmatpush2.msra.mxu0 0.0
          %845 = vmatprep.subr.mxu0 0.0
          %846 = vmatpush2.msra.mxu0 0.0
          %847 = vmatprep.subr.mxu0 0.0
          %848 = vmatpush2.msra.mxu0 0.0
          %849 = vmatprep.subr.mxu0 0.0
          %850 = vmatpush2.msra.mxu0 0.0
          %851 = vmatprep.subr.mxu0 0.0
          %852 = vmatpush2.msra.mxu0 0.0
          %853 = vmatprep.subr.mxu0 0.0
          %854 = vmatpush2.msra.mxu0 0.0
          %855 = vmatprep.subr.mxu0 0.0
          %856 = vmatpush2.msra.mxu0 0.0
          %857 = vmatprep.subr.mxu0 0.0
          %858 = vmatpush2.msra.mxu0 0.0
          %859 = vmatprep.subr.mxu0 0.0
          %860 = vmatpush2.msra.mxu0 0.0
          %861 = vmatprep.subr.mxu0 0.0
          %862 = vmatpush2.msra.mxu0 0.0
          %863 = vmatprep.subr.mxu0 0.0
          %864 = vmatpush2.msra.mxu0 0.0
          %865 = vmatprep.subr.mxu0 0.0
          %866 = vmatpush2.msra.mxu0 0.0
          %867 = vmatprep.subr.mxu0 0.0
          %868 = vmatpush2.msra.mxu0 0.0
          %869 = vmatprep.subr.mxu0 0.0
          %870 = vmatpush2.msra.mxu0 0.0
          %871 = vmatprep.subr.mxu0 0.0
          %872 = vmatpush2.msra.mxu0 0.0
          %873 = vmatprep.mubr.f32.mxu0 0.0
          %874 = vmatmul.mubr.f32.gmra.mxu0 %v807
          %v875 = vpop.f32.mrf.mxu0
          %v876 = vadd.f32 0.0, %v875
          %v877 = vpop.f32.mrf.mxu0
          %878 = vdwg.mxu0
          %v879 = vadd.f32 %v710, %v876
          %v880 = vld [vmem:[%s3] sm:$0xff]
          %v881 = vld [vmem:[%s3 + $0x8] sm:$0xff]
          %v882 = vld [vmem:[%s3 + $0x10] sm:$0xff]
          %v883 = vld [vmem:[%s3 + $0x18] sm:$0xff]
          %v884 = vld [vmem:[%s3 + $0x20] sm:$0xff]
          %v885 = vld [vmem:[%s3 + $0x28] sm:$0xff]
          %v886 = vld [vmem:[%s3 + $0x30] sm:$0xff]
          %v887 = vld [vmem:[%s3 + $0x38] sm:$0xff]
          %v888 = vld [vmem:[%s3 + $0x40] sm:$0xff]
          %v889 = vld [vmem:[%s3 + $0x48] sm:$0xff]
          %v890 = vld [vmem:[%s3 + $0x50] sm:$0xff]
          %v891 = vld [vmem:[%s3 + $0x58] sm:$0xff]
          %v892 = vld [vmem:[%s3 + $0x60] sm:$0xff]
          %v893 = vld [vmem:[%s3 + $0x68] sm:$0xff]
          %v894 = vld [vmem:[%s3 + $0x70] sm:$0xff]
          %v895 = vld [vmem:[%s3 + $0x78] sm:$0xff]
          %vm896 = vcmask 31744
          %v897 = vsel %vm896, %v880, 0.0
          %898 = vadd.xlane.f32.xlu0 %v897
          %v899 = vpop.xlane.xlu0 %898
          %v900 = vsel %vm896, %v881, 0.0
          %901 = vadd.xlane.f32.xlu0 %v900
          %v902 = vpop.xlane.xlu0 %901
          %v903 = vsel %vm896, %v882, 0.0
          %904 = vadd.xlane.f32.xlu0 %v903
          %v905 = vpop.xlane.xlu0 %904
          %v906 = vsel %vm896, %v883, 0.0
          %907 = vadd.xlane.f32.xlu0 %v906
          %v908 = vpop.xlane.xlu0 %907
          %v909 = vsel %vm896, %v884, 0.0
          %910 = vadd.xlane.f32.xlu0 %v909
          %v911 = vpop.xlane.xlu0 %910
          %v912 = vsel %vm896, %v885, 0.0
          %913 = vadd.xlane.f32.xlu0 %v912
          %v914 = vpop.xlane.xlu0 %913
          %v915 = vsel %vm896, %v886, 0.0
          %916 = vadd.xlane.f32.xlu0 %v915
          %v917 = vpop.xlane.xlu0 %916
          %v918 = vsel %vm896, %v887, 0.0
          %919 = vadd.xlane.f32.xlu0 %v918
          %v920 = vpop.xlane.xlu0 %919
          %v921 = vsel %vm896, %v888, 0.0
          %922 = vadd.xlane.f32.xlu0 %v921
          %v923 = vpop.xlane.xlu0 %922
          %v924 = vsel %vm896, %v889, 0.0
          %925 = vadd.xlane.f32.xlu0 %v924
          %v926 = vpop.xlane.xlu0 %925
          %v927 = vsel %vm896, %v890, 0.0
          %928 = vadd.xlane.f32.xlu0 %v927
          %v929 = vpop.xlane.xlu0 %928
          %v930 = vsel %vm896, %v891, 0.0
          %931 = vadd.xlane.f32.xlu0 %v930
          %v932 = vpop.xlane.xlu0 %931
          %v933 = vsel %vm896, %v892, 0.0
          %934 = vadd.xlane.f32.xlu0 %v933
          %v935 = vpop.xlane.xlu0 %934
          %v936 = vsel %vm896, %v893, 0.0
          %937 = vadd.xlane.f32.xlu0 %v936
          %v938 = vpop.xlane.xlu0 %937
          %v939 = vsel %vm896, %v894, 0.0
          %940 = vadd.xlane.f32.xlu0 %v939
          %v941 = vpop.xlane.xlu0 %940
          %v942 = vsel %vm896, %v895, 0.0
          %943 = vadd.xlane.f32.xlu0 %v942
          %v944 = vpop.xlane.xlu0 %943
          %v945 = vmul.f32 %v899, 0.25
          %v946 = vmul.f32 %v902, 0.25
          %v947 = vmul.f32 %v905, 0.25
          %v948 = vmul.f32 %v908, 0.25
          %v949 = vmul.f32 %v911, 0.25
          %v950 = vmul.f32 %v914, 0.25
          %v951 = vmul.f32 %v917, 0.25
          %v952 = vmul.f32 %v920, 0.25
          %v953 = vmul.f32 %v923, 0.25
          %v954 = vmul.f32 %v926, 0.25
          %v955 = vmul.f32 %v929, 0.25
          %v956 = vmul.f32 %v932, 0.25
          %v957 = vmul.f32 %v935, 0.25
          %v958 = vmul.f32 %v938, 0.25
          %v959 = vmul.f32 %v941, 0.25
          %v960 = vmul.f32 %v944, 0.25
          %v961 = vld [vmem:[%s7] sm:$0xff]
          %v962 = vld [vmem:[%s7 + $0x8] sm:$0xff]
          %v963 = vld [vmem:[%s7 + $0x10] sm:$0xff]
          %v964 = vld [vmem:[%s7 + $0x18] sm:$0xff]
          %v965 = vld [vmem:[%s7 + $0x20] sm:$0xff]
          %v966 = vld [vmem:[%s7 + $0x28] sm:$0xff]
          %v967 = vld [vmem:[%s7 + $0x30] sm:$0xff]
          %v968 = vld [vmem:[%s7 + $0x38] sm:$0xff]
          %v985 = vlaneseq
          %v986 = vshrl.u32 %v985, 7
          %v987 = vsub.s32 %v498, %v986
          %v988 = vrot.slane %v945, %v987
          %v989 = vlaneseq
          %v990 = vshrl.u32 %v989, 7
          %v991 = vsub.s32 %v620, %v990
          %v992 = vrot.slane %v946, %v991
          %v993 = vsel %vm625, %v992, %v988
          %v994 = vlaneseq
          %v995 = vshrl.u32 %v994, 7
          %v996 = vsub.s32 %v772, %v995
          %v997 = vrot.slane %v947, %v996
          %v998 = vsel %vm777, %v997, %v993
          %v999 = vlaneseq
          %v1000 = vshrl.u32 %v999, 7
          %v1001 = vsub.s32 %v779, %v1000
          %v1002 = vrot.slane %v948, %v1001
          %v1003 = vsel %vm784, %v1002, %v998
          %v1004 = vadd.s32 %v498, 4294967264
          %v1005 = vlaneseq
          %v1006 = vshrl.u32 %v1005, 7
          %v1007 = vsub.s32 %v1004, %v1006
          %v1008 = vrot.slane %v949, %v1007
          %vm1009 = vcmask 326912
          %v1010 = vsel %vm1009, %v1008, %v1003
          %v1011 = vadd.s32 %v498, 4294967256
          %v1012 = vlaneseq
          %v1013 = vshrl.u32 %v1012, 7
          %v1014 = vsub.s32 %v1011, %v1013
          %v1015 = vrot.slane %v950, %v1014
          %vm1016 = vcmask 392512
          %v1017 = vsel %vm1016, %v1015, %v1010
          %v1018 = vadd.s32 %v498, 4294967248
          %v1019 = vlaneseq
          %v1020 = vshrl.u32 %v1019, 7
          %v1021 = vsub.s32 %v1018, %v1020
          %v1022 = vrot.slane %v951, %v1021
          %vm1023 = vcmask 458112
          %v1024 = vsel %vm1023, %v1022, %v1017
          %v1025 = vadd.s32 %v498, 4294967240
          %v1026 = vlaneseq
          %v1027 = vshrl.u32 %v1026, 7
          %v1028 = vsub.s32 %v1025, %v1027
          %v1029 = vrot.slane %v952, %v1028
          %vm1030 = vcmask 523712
          %v1031 = vsel %vm1030, %v1029, %v1024
          %v1032 = vlaneseq
          %v1033 = vshrl.u32 %v1032, 7
          %v1034 = vsub.s32 %v498, %v1033
          %v1035 = vrot.slane %v953, %v1034
          %v1036 = vlaneseq
          %v1037 = vshrl.u32 %v1036, 7
          %v1038 = vsub.s32 %v620, %v1037
          %v1039 = vrot.slane %v954, %v1038
          %v1040 = vsel %vm625, %v1039, %v1035
          %v1041 = vlaneseq
          %v1042 = vshrl.u32 %v1041, 7
          %v1043 = vsub.s32 %v772, %v1042
          %v1044 = vrot.slane %v955, %v1043
          %v1045 = vsel %vm777, %v1044, %v1040
          %v1046 = vlaneseq
          %v1047 = vshrl.u32 %v1046, 7
          %v1048 = vsub.s32 %v779, %v1047
          %v1049 = vrot.slane %v956, %v1048
          %v1050 = vsel %vm784, %v1049, %v1045
          %v1051 = vlaneseq
          %v1052 = vshrl.u32 %v1051, 7
          %v1053 = vsub.s32 %v1004, %v1052
          %v1054 = vrot.slane %v957, %v1053
          %v1055 = vsel %vm1009, %v1054, %v1050
          %v1056 = vlaneseq
          %v1057 = vshrl.u32 %v1056, 7
          %v1058 = vsub.s32 %v1011, %v1057
          %v1059 = vrot.slane %v958, %v1058
          %v1060 = vsel %vm1016, %v1059, %v1055
          %v1061 = vlaneseq
          %v1062 = vshrl.u32 %v1061, 7
          %v1063 = vsub.s32 %v1018, %v1062
          %v1064 = vrot.slane %v959, %v1063
          %v1065 = vsel %vm1023, %v1064, %v1060
          %v1066 = vlaneseq
          %v1067 = vshrl.u32 %v1066, 7
          %v1068 = vsub.s32 %v1025, %v1067
          %v1069 = vrot.slane %v960, %v1068
          %v1070 = vsel %vm1030, %v1069, %v1065
          %v1071 = vsel %vm507, %v1070, %v1031
          %v1072 = vsel %vm593, %v1071, 0
          %1074 = vmatprep.subr.mxu0 0.0
          %1075 = vmatpush1.msra.mxu0 0.0
          %1076 = vmatprep.subr.mxu0 0.0
          %1077 = vmatpush1.msra.mxu0 0.0
          %1078 = vmatprep.subr.mxu0 0.0
          %1079 = vmatpush1.msra.mxu0 0.0
          %1080 = vmatprep.subr.mxu0 0.0
          %1081 = vmatpush1.msra.mxu0 0.0
          %1082 = vmatprep.subr.mxu0 0.0
          %1083 = vmatpush1.msra.mxu0 0.0
          %1084 = vmatprep.subr.mxu0 0.0
          %1085 = vmatpush1.msra.mxu0 0.0
          %1086 = vmatprep.subr.mxu0 0.0
          %1087 = vmatpush1.msra.mxu0 0.0
          %1088 = vmatprep.subr.mxu0 0.0
          %1089 = vmatpush1.msra.mxu0 0.0
          %1090 = vmatprep.subr.mxu0 0.0
          %1091 = vmatpush1.msra.mxu0 %v968
          %1092 = vmatprep.subr.mxu0 0.0
          %1093 = vmatpush1.msra.mxu0 %v967
          %1094 = vmatprep.subr.mxu0 0.0
          %1095 = vmatpush1.msra.mxu0 %v966
          %1096 = vmatprep.subr.mxu0 0.0
          %1097 = vmatpush1.msra.mxu0 %v965
          %1098 = vmatprep.subr.mxu0 0.0
          %1099 = vmatpush1.msra.mxu0 %v964
          %1100 = vmatprep.subr.mxu0 0.0
          %1101 = vmatpush1.msra.mxu0 %v963
          %1102 = vmatprep.subr.mxu0 0.0
          %1103 = vmatpush1.msra.mxu0 %v962
          %1104 = vmatprep.subr.mxu0 0.0
          %1105 = vmatpush1.msra.mxu0 %v961
          %1106 = vmatprep.subr.mxu0 0.0
          %1107 = vmatpush2.msra.mxu0 0.0
          %1108 = vmatprep.subr.mxu0 0.0
          %1109 = vmatpush2.msra.mxu0 0.0
          %1110 = vmatprep.subr.mxu0 0.0
          %1111 = vmatpush2.msra.mxu0 0.0
          %1112 = vmatprep.subr.mxu0 0.0
          %1113 = vmatpush2.msra.mxu0 0.0
          %1114 = vmatprep.subr.mxu0 0.0
          %1115 = vmatpush2.msra.mxu0 0.0
          %1116 = vmatprep.subr.mxu0 0.0
          %1117 = vmatpush2.msra.mxu0 0.0
          %1118 = vmatprep.subr.mxu0 0.0
          %1119 = vmatpush2.msra.mxu0 0.0
          %1120 = vmatprep.subr.mxu0 0.0
          %1121 = vmatpush2.msra.mxu0 0.0
          %1122 = vmatprep.subr.mxu0 0.0
          %1123 = vmatpush2.msra.mxu0 0.0
          %1124 = vmatprep.subr.mxu0 0.0
          %1125 = vmatpush2.msra.mxu0 0.0
          %1126 = vmatprep.subr.mxu0 0.0
          %1127 = vmatpush2.msra.mxu0 0.0
          %1128 = vmatprep.subr.mxu0 0.0
          %1129 = vmatpush2.msra.mxu0 0.0
          %1130 = vmatprep.subr.mxu0 0.0
          %1131 = vmatpush2.msra.mxu0 0.0
          %1132 = vmatprep.subr.mxu0 0.0
          %1133 = vmatpush2.msra.mxu0 0.0
          %1134 = vmatprep.subr.mxu0 0.0
          %1135 = vmatpush2.msra.mxu0 0.0
          %1136 = vmatprep.subr.mxu0 0.0
          %1137 = vmatpush2.msra.mxu0 0.0
          %1138 = vmatprep.mubr.f32.mxu0 0.0
          %1139 = vmatmul.mubr.f32.gmra.mxu0 %v1072
          %v1140 = vpop.f32.mrf.mxu0
          %v1141 = vadd.f32 0.0, %v1140
          %v1142 = vpop.f32.mrf.mxu0
          %1143 = vdwg.mxu0
          %v1144 = vadd.f32 %v879, %v1141
          %v1145 = vmax.f32 %v1144, 0.0
          %v1146 = vld [vmem:[%s9] sm:$0xff]
          %v1147 = vld [vmem:[%s9 + $0x8] sm:$0xff]
          %v1148 = vld [vmem:[%s9 + $0x10] sm:$0xff]
          %v1149 = vld [vmem:[%s9 + $0x18] sm:$0xff]
          %v1150 = vld [vmem:[%s9 + $0x20] sm:$0xff]
          %v1151 = vld [vmem:[%s9 + $0x28] sm:$0xff]
          %v1152 = vld [vmem:[%s9 + $0x30] sm:$0xff]
          %v1153 = vld [vmem:[%s9 + $0x38] sm:$0xff]
          %v1154 = vld [vmem:[%s10] sm:$0x1]
          %v1156 = vlaneseq
          %v1157 = vshrl.u32 %v1156, 7
          %v1158 = vsub.s32 0, %v1157
          %v1159 = vrot.slane %v1154, %v1158
          %v1162 = vsel %vm593, %v1145, 0
          %1164 = vmatprep.subr.mxu0 0.0
          %1165 = vmatpush1.msra.mxu0 0.0
          %1166 = vmatprep.subr.mxu0 0.0
          %1167 = vmatpush1.msra.mxu0 0.0
          %1168 = vmatprep.subr.mxu0 0.0
          %1169 = vmatpush1.msra.mxu0 0.0
          %1170 = vmatprep.subr.mxu0 0.0
          %1171 = vmatpush1.msra.mxu0 0.0
          %1172 = vmatprep.subr.mxu0 0.0
          %1173 = vmatpush1.msra.mxu0 0.0
          %1174 = vmatprep.subr.mxu0 0.0
          %1175 = vmatpush1.msra.mxu0 0.0
          %1176 = vmatprep.subr.mxu0 0.0
          %1177 = vmatpush1.msra.mxu0 0.0
          %1178 = vmatprep.subr.mxu0 0.0
          %1179 = vmatpush1.msra.mxu0 0.0
          %1180 = vmatprep.subr.mxu0 0.0
          %1181 = vmatpush1.msra.mxu0 %v1153
          %1182 = vmatprep.subr.mxu0 0.0
          %1183 = vmatpush1.msra.mxu0 %v1152
          %1184 = vmatprep.subr.mxu0 0.0
          %1185 = vmatpush1.msra.mxu0 %v1151
          %1186 = vmatprep.subr.mxu0 0.0
          %1187 = vmatpush1.msra.mxu0 %v1150
          %1188 = vmatprep.subr.mxu0 0.0
          %1189 = vmatpush1.msra.mxu0 %v1149
          %1190 = vmatprep.subr.mxu0 0.0
          %1191 = vmatpush1.msra.mxu0 %v1148
          %1192 = vmatprep.subr.mxu0 0.0
          %1193 = vmatpush1.msra.mxu0 %v1147
          %1194 = vmatprep.subr.mxu0 0.0
          %1195 = vmatpush1.msra.mxu0 %v1146
          %1196 = vmatprep.subr.mxu0 0.0
          %1197 = vmatpush2.msra.mxu0 0.0
          %1198 = vmatprep.subr.mxu0 0.0
          %1199 = vmatpush2.msra.mxu0 0.0
          %1200 = vmatprep.subr.mxu0 0.0
          %1201 = vmatpush2.msra.mxu0 0.0
          %1202 = vmatprep.subr.mxu0 0.0
          %1203 = vmatpush2.msra.mxu0 0.0
          %1204 = vmatprep.subr.mxu0 0.0
          %1205 = vmatpush2.msra.mxu0 0.0
          %1206 = vmatprep.subr.mxu0 0.0
          %1207 = vmatpush2.msra.mxu0 0.0
          %1208 = vmatprep.subr.mxu0 0.0
          %1209 = vmatpush2.msra.mxu0 0.0
          %1210 = vmatprep.subr.mxu0 0.0
          %1211 = vmatpush2.msra.mxu0 0.0
          %1212 = vmatprep.subr.mxu0 0.0
          %1213 = vmatpush2.msra.mxu0 0.0
          %1214 = vmatprep.subr.mxu0 0.0
          %1215 = vmatpush2.msra.mxu0 0.0
          %1216 = vmatprep.subr.mxu0 0.0
          %1217 = vmatpush2.msra.mxu0 0.0
          %1218 = vmatprep.subr.mxu0 0.0
          %1219 = vmatpush2.msra.mxu0 0.0
          %1220 = vmatprep.subr.mxu0 0.0
          %1221 = vmatpush2.msra.mxu0 0.0
          %1222 = vmatprep.subr.mxu0 0.0
          %1223 = vmatpush2.msra.mxu0 0.0
          %1224 = vmatprep.subr.mxu0 0.0
          %1225 = vmatpush2.msra.mxu0 0.0
          %1226 = vmatprep.subr.mxu0 0.0
          %1227 = vmatpush2.msra.mxu0 0.0
          %1228 = vmatprep.mubr.f32.mxu0 0.0
          %1229 = vmatmul.mubr.f32.gmra.mxu0 %v1162
          %v1230 = vpop.f32.mrf.mxu0
          %v1231 = vadd.f32 %v1159, %v1230
          %v1232 = vpop.f32.mrf.mxu0
          %1233 = vdwg.mxu0
          %v1234 = vmax.f32 %v1231, 0.0
          %v1235 = vld [vmem:[%s11] sm:$0xff]
          %v1236 = vld [vmem:[%s11 + $0x8] sm:$0xff]
          %v1237 = vld [vmem:[%s11 + $0x10] sm:$0xff]
          %v1238 = vld [vmem:[%s11 + $0x18] sm:$0xff]
          %v1239 = vld [vmem:[#allocation3] sm:$0x1]
          %v1241 = vlaneseq
          %v1242 = vshrl.u32 %v1241, 7
          %v1243 = vsub.s32 0, %v1242
          %v1244 = vrot.slane %v1239, %v1243
          %v1247 = vsel %vm806, %v1234, 0
          %1249 = vmatprep.subr.mxu0 0.0
          %1250 = vmatpush1.msra.mxu0 0.0
          %1251 = vmatprep.subr.mxu0 0.0
          %1252 = vmatpush1.msra.mxu0 0.0
          %1253 = vmatprep.subr.mxu0 0.0
          %1254 = vmatpush1.msra.mxu0 0.0
          %1255 = vmatprep.subr.mxu0 0.0
          %1256 = vmatpush1.msra.mxu0 0.0
          %1257 = vmatprep.subr.mxu0 0.0
          %1258 = vmatpush1.msra.mxu0 0.0
          %1259 = vmatprep.subr.mxu0 0.0
          %1260 = vmatpush1.msra.mxu0 0.0
          %1261 = vmatprep.subr.mxu0 0.0
          %1262 = vmatpush1.msra.mxu0 0.0
          %1263 = vmatprep.subr.mxu0 0.0
          %1264 = vmatpush1.msra.mxu0 0.0
          %1265 = vmatprep.subr.mxu0 0.0
          %1266 = vmatpush1.msra.mxu0 0.0
          %1267 = vmatprep.subr.mxu0 0.0
          %1268 = vmatpush1.msra.mxu0 0.0
          %1269 = vmatprep.subr.mxu0 0.0
          %1270 = vmatpush1.msra.mxu0 0.0
          %1271 = vmatprep.subr.mxu0 0.0
          %1272 = vmatpush1.msra.mxu0 0.0
          %1273 = vmatprep.subr.mxu0 0.0
          %1274 = vmatpush1.msra.mxu0 %v1238
          %1275 = vmatprep.subr.mxu0 0.0
          %1276 = vmatpush1.msra.mxu0 %v1237
          %1277 = vmatprep.subr.mxu0 0.0
          %1278 = vmatpush1.msra.mxu0 %v1236
          %1279 = vmatprep.subr.mxu0 0.0
          %1280 = vmatpush1.msra.mxu0 %v1235
          %1281 = vmatprep.subr.mxu0 0.0
          %1282 = vmatpush2.msra.mxu0 0.0
          %1283 = vmatprep.subr.mxu0 0.0
          %1284 = vmatpush2.msra.mxu0 0.0
          %1285 = vmatprep.subr.mxu0 0.0
          %1286 = vmatpush2.msra.mxu0 0.0
          %1287 = vmatprep.subr.mxu0 0.0
          %1288 = vmatpush2.msra.mxu0 0.0
          %1289 = vmatprep.subr.mxu0 0.0
          %1290 = vmatpush2.msra.mxu0 0.0
          %1291 = vmatprep.subr.mxu0 0.0
          %1292 = vmatpush2.msra.mxu0 0.0
          %1293 = vmatprep.subr.mxu0 0.0
          %1294 = vmatpush2.msra.mxu0 0.0
          %1295 = vmatprep.subr.mxu0 0.0
          %1296 = vmatpush2.msra.mxu0 0.0
          %1297 = vmatprep.subr.mxu0 0.0
          %1298 = vmatpush2.msra.mxu0 0.0
          %1299 = vmatprep.subr.mxu0 0.0
          %1300 = vmatpush2.msra.mxu0 0.0
          %1301 = vmatprep.subr.mxu0 0.0
          %1302 = vmatpush2.msra.mxu0 0.0
          %1303 = vmatprep.subr.mxu0 0.0
          %1304 = vmatpush2.msra.mxu0 0.0
          %1305 = vmatprep.subr.mxu0 0.0
          %1306 = vmatpush2.msra.mxu0 0.0
          %1307 = vmatprep.subr.mxu0 0.0
          %1308 = vmatpush2.msra.mxu0 0.0
          %1309 = vmatprep.subr.mxu0 0.0
          %1310 = vmatpush2.msra.mxu0 0.0
          %1311 = vmatprep.subr.mxu0 0.0
          %1312 = vmatpush2.msra.mxu0 0.0
          %1313 = vmatprep.mubr.f32.mxu0 0.0
          %1314 = vmatmul.mubr.f32.gmra.mxu0 %v1247
          %v1315 = vpop.f32.mrf.mxu0
          %v1316 = vadd.f32 %v1244, %v1315
          %v1317 = vpop.f32.mrf.mxu0
          %1318 = vdwg.mxu0
          %v1319 = vsub.f32 0.0, %v1316
          %v1320 = vmul.f32 %v1319, 1.442695
          %v1321 = vpow.pop %v1320
          %v1322 = vadd.f32 %v1321, 1.0
          %v1323 = vrcp.pop %v1322
          %v1324 = vmul.f32 %v1323, 0.49
          %v1325 = vadd.f32 %v1324, 0.01
          %vm1326 = vcmask 1024
          %1327 = vst.msk [vmem:[%s13] sm:$0x3] %vm1326, %v1325
        $region118: #{tpu_custom_call.1} parent=105 // pred_fallthru
          _
        // Predicated region
        $region119: #{tpu_custom_call.1} parent=105 // pred_check
          %p1328 = pneg %p317
        $region120: #{tpu_custom_call.1} parent=105 // pred_check_branch
          %1330 = sbr.rel (%p1328) target = $region122
        $region121: #{tpu_custom_call.1} parent=105 // pred_region
          _
        $region122: #{tpu_custom_call.1} parent=105 // pred_fallthru
          _
        // Predicated region
        $region123: #{tpu_custom_call.1} parent=105 // pred_check
          %p1331 = pneg %p317
        $region124: #{tpu_custom_call.1} parent=105 // pred_check_branch
          %1333 = sbr.rel (%p1331) target = $region126
        $region125: #{tpu_custom_call.1} parent=105 // pred_region
          _
        $region126: #{tpu_custom_call.1} parent=105 // pred_fallthru
          _
      $region106: #{tpu_custom_call.1} parent=5 // pred_fallthru
        _
      %p1334 = scmp.le.s32.totalorder 2, %s21
      // Predicated region
      $region127: #{tpu_custom_call.1} parent=5 // pred_check
        %p1335 = pneg %p1334
      $region128: #{tpu_custom_call.1} parent=5 // pred_check_branch
        %1337 = sbr.rel (%p1335) target = $region130
      $region129: #{tpu_custom_call.1} parent=5 // pred_region
        %s1338 = ssub.s32 %s21, 2
      $region130: #{tpu_custom_call.1} parent=5 // pred_fallthru
        _
    $region6: #{tpu_custom_call.1} parent=1 // loop_footer
      %s25 = sadd.s32 1, %s21
    $region7: #{tpu_custom_call.1} parent=1 // loop_footer_branch
      %20 = sbr.rel target = $region3
    $region8: #{tpu_custom_call.1} parent=1 // loop_exit
      _

</llo_original>
